<compile_context>
chip_gen: v7x
topology: tpu7x:2x2x1
jax: 0.10.0
libtpu: 0.0.40
codegen_flags: <defaults>
</compile_context>

<pallas_src>
import jax
import jax.numpy as jnp
from jax.experimental import pallas as pl
from jax.experimental.pallas import tpu as pltpu

DIMS = [784, 512, 256, 128, 64, 32, 10]
# Lane-padded widths used inside the kernel (64/32/10 -> 128).
PAD_DIMS = [784, 512, 256, 128, 128, 128, 128]
OUT_PAD = 128   # lane-dense output width (classes padded 10 -> 128)
NEG_BIG = -1e30


def _round_up(x, m):
    return (x + m - 1) // m * m


def mlp_kernel(x_ref,
               w1, b1, w2, b2, w3, b3, w4, b4, w5, b5, w6, b6,
               out_ref):
    # x_ref: (TB, 784) f32 activation tile; weights bf16, biases f32.
    h = x_ref[...].astype(jnp.bfloat16)          # in-kernel cast, cheap VPU op

    def lin_relu(h_bf16, w_ref, b_ref):
        y = jnp.dot(h_bf16, w_ref[...], preferred_element_type=jnp.float32)
        y = y + b_ref[...]                       # f32 bias add
        return jnp.maximum(y, 0.0).astype(jnp.bfloat16)

    h = lin_relu(h, w1, b1)
    h = lin_relu(h, w2, b2)
    h = lin_relu(h, w3, b3)
    h = lin_relu(h, w4, b4)
    h = lin_relu(h, w5, b5)

    # Final layer into a lane-dense (TB, 128) block.  Columns 10..127 of the
    # padded bias are -1e30, so exp() underflows to 0 and they never win the
    # max -> the axis-1 reductions below only "see" the 10 real classes.
    logits = jnp.dot(h, w6[...], preferred_element_type=jnp.float32) + b6[...]

    m = jnp.max(logits, axis=1, keepdims=True)
    shifted = logits - m
    lse = jnp.log(jnp.sum(jnp.exp(shifted), axis=1, keepdims=True))
    out_ref[...] = shifted - lse


def init_params(key):
    """Deterministic parameter init (PyTorch-Linear-style uniform bounds)."""
    params = []
    for i in range(6):
        fan_in, fan_out = DIMS[i], DIMS[i + 1]
        key, kw, kb = jax.random.split(key, 3)
        bound = 1.0 / jnp.sqrt(fan_in)
        w = jax.random.uniform(kw, (fan_in, fan_out), jnp.float32, -bound, bound)
        b = jax.random.uniform(kb, (1, fan_out), jnp.float32, -bound, bound)
        params.append((w, b))
    return params


def prepare_params(params):
    """Cast weights to bf16 and pad the narrow tail layers to 128 lanes.

    Zero-padded weight rows/cols + zero bias keep the math identical (padded
    activation columns are ReLU(0)=0 and multiply zero weight rows).  The
    final layer's padded bias columns are -1e30 so log_softmax ignores them.
    """
    flat = []
    last = len(params) - 1
    for i, (w, b) in enumerate(params):
        kin, kout = PAD_DIMS[i], PAD_DIMS[i + 1]
        if (kin, kout) == w.shape and i != last:
            wp = w.astype(jnp.bfloat16)
            bp = b.astype(jnp.float32)
        else:
            wp = (jnp.zeros((kin, kout), jnp.bfloat16)
                  .at[:w.shape[0], :w.shape[1]].set(w.astype(jnp.bfloat16)))
            fill = NEG_BIG if i == last else 0.0
            bp = (jnp.full((1, kout), fill, jnp.float32)
                  .at[:, :b.shape[1]].set(b.astype(jnp.float32)))
        flat.extend([wp, bp])
    return flat


def net_forward(x, params, tb=1024):
    # x: (B, 1, 28, 28) or (B, 784); flatten like x.view(-1, 784), keep f32.
    x = x.astype(jnp.float32).reshape(-1, 784)
    B = x.shape[0]

    # Batch tile: multiple of 16 (bf16 sublane packing); clamp so the grid has
    # >=2 steps when possible (lets v7x's two TensorCores split the batch).
    half = _round_up(max((B + 1) // 2, 1), 16)
    TB = max(16, min(tb, half))
    num_tiles = (B + TB - 1) // TB
    B_pad = num_tiles * TB
    if B_pad != B:
        x = jnp.pad(x, ((0, B_pad - B), (0, 0)))   # small remainder-only pad

    flat_params = prepare_params(params)

    # Activation tile (TB, 784): last dim == full array dim, so 784 is legal.
    in_specs = [pl.BlockSpec((TB, 784), lambda i: (i, 0))]
    for arr in flat_params:
        # Whole-array, VMEM-resident across all grid steps (constant index_map).
        # (Single-buffering these via pipeline_mode would save ~1.3 MB VMEM,
        #  but the default is kept for maximum compiler compatibility.)
        in_specs.append(pl.BlockSpec(arr.shape, lambda i: (0, 0)))

    out_p = pl.pallas_call(
        mlp_kernel,
        out_shape=jax.ShapeDtypeStruct((B_pad, OUT_PAD), jnp.float32),
        grid_spec=pltpu.PrefetchScalarGridSpec(
            num_scalar_prefetch=0,
            grid=(num_tiles,),
            in_specs=in_specs,
            out_specs=pl.BlockSpec((TB, OUT_PAD), lambda i: (i, 0)),
        ),
        compiler_params=pltpu.CompilerParams(
            dimension_semantics=("parallel",),
            vmem_limit_bytes=32 << 20,
        ),
    )(x, *flat_params)

    return out_p[:B, :10]


def reference_forward(x, params):
    """Pure-JAX reference mimicking the kernel's bf16-matmul / f32-accumulate."""
    h = x.astype(jnp.float32).reshape(-1, 784)
    for i, (w, b) in enumerate(params):
        h = jnp.dot(h.astype(jnp.bfloat16), w.astype(jnp.bfloat16),
                    preferred_element_type=jnp.float32) + b
        if i < 5:
            h = jnp.maximum(h, 0.0)
    return jax.nn.log_softmax(h, axis=1)


if __name__ == "__main__":
    key = jax.random.PRNGKey(0)
    k_x, k_p = jax.random.split(key)

    params = init_params(k_p)

    # MNIST-style small batch: (B, 1, 28, 28)
    x = jax.random.normal(k_x, (2, 1, 28, 28), jnp.float32)
    out = jax.block_until_ready(net_forward(x, params))
    ref = reference_forward(x, params)
    assert out.shape == (2, 10)
    assert jnp.all(jnp.isfinite(out)), "non-finite output"
    assert jnp.allclose(out, ref, atol=1e-2, rtol=1e-2), "mismatch vs reference"

    # Second check exercising >1 grid step and remainder-row padding.
    x2 = jax.random.normal(k_x, (48, 1, 28, 28), jnp.float32)
    out2 = jax.block_until_ready(net_forward(x2, params))
    ref2 = reference_forward(x2, params)
    assert out2.shape == (48, 10)
    assert jnp.all(jnp.isfinite(out2)), "non-finite output (multi-tile)"
    assert jnp.allclose(out2, ref2, atol=1e-2, rtol=1e-2), "mismatch (multi-tile)"

    print("KERNEL_OK")
</pallas_src>

<mosaic_0001>
module attributes {stable_mosaic.version = 11 : i64} {
  func.func @mlp_kernel(%arg0: i32, %arg1: memref<16x784xf32, #tpu.memory_space<vmem>>, %arg2: memref<784x512xbf16, #tpu.memory_space<vmem>>, %arg3: memref<1x512xf32, #tpu.memory_space<vmem>>, %arg4: memref<512x256xbf16, #tpu.memory_space<vmem>>, %arg5: memref<1x256xf32, #tpu.memory_space<vmem>>, %arg6: memref<256x128xbf16, #tpu.memory_space<vmem>>, %arg7: memref<1x128xf32, #tpu.memory_space<vmem>>, %arg8: memref<128x128xbf16, #tpu.memory_space<vmem>>, %arg9: memref<1x128xf32, #tpu.memory_space<vmem>>, %arg10: memref<128x128xbf16, #tpu.memory_space<vmem>>, %arg11: memref<1x128xf32, #tpu.memory_space<vmem>>, %arg12: memref<128x128xbf16, #tpu.memory_space<vmem>>, %arg13: memref<1x128xf32, #tpu.memory_space<vmem>>, %arg14: memref<16x128xf32, #tpu.memory_space<vmem>>) attributes {dimension_semantics = [#tpu.dimension_semantics<parallel>], iteration_bounds = array<i64: 1>, scalar_prefetch = 0 : i64, scratch_operands = 0 : i64, tpu.core_type = #tpu.core_type<tc>, window_params = [{transform_indices = @transform_0, window_bounds = array<i64: 16, 784>}, {pipeline_mode = #tpu.pipeline_mode<synchronous>, transform_indices = @transform_1, window_bounds = array<i64: 784, 512>}, {pipeline_mode = #tpu.pipeline_mode<synchronous>, transform_indices = @transform_2, window_bounds = array<i64: 1, 512>}, {pipeline_mode = #tpu.pipeline_mode<synchronous>, transform_indices = @transform_3, window_bounds = array<i64: 512, 256>}, {pipeline_mode = #tpu.pipeline_mode<synchronous>, transform_indices = @transform_4, window_bounds = array<i64: 1, 256>}, {pipeline_mode = #tpu.pipeline_mode<synchronous>, transform_indices = @transform_5, window_bounds = array<i64: 256, 128>}, {pipeline_mode = #tpu.pipeline_mode<synchronous>, transform_indices = @transform_6, window_bounds = array<i64: 1, 128>}, {pipeline_mode = #tpu.pipeline_mode<synchronous>, transform_indices = @transform_7, window_bounds = array<i64: 128, 128>}, {pipeline_mode = #tpu.pipeline_mode<synchronous>, transform_indices = @transform_8, window_bounds = array<i64: 1, 128>}, {pipeline_mode = #tpu.pipeline_mode<synchronous>, transform_indices = @transform_9, window_bounds = array<i64: 128, 128>}, {pipeline_mode = #tpu.pipeline_mode<synchronous>, transform_indices = @transform_10, window_bounds = array<i64: 1, 128>}, {pipeline_mode = #tpu.pipeline_mode<synchronous>, transform_indices = @transform_11, window_bounds = array<i64: 128, 128>}, {pipeline_mode = #tpu.pipeline_mode<synchronous>, transform_indices = @transform_12, window_bounds = array<i64: 1, 128>}, {transform_indices = @transform_13, window_bounds = array<i64: 16, 128>}]} {
    %c0 = arith.constant 0 : index
    %c0_0 = arith.constant 0 : index
    %0 = vector.load %arg1[%c0, %c0_0] : memref<16x784xf32, #tpu.memory_space<vmem>>, vector<16x784xf32>
    %1 = arith.truncf %0 : vector<16x784xf32> to vector<16x784xbf16>
    %c0_1 = arith.constant 0 : index
    %c0_2 = arith.constant 0 : index
    %2 = vector.load %arg2[%c0_1, %c0_2] : memref<784x512xbf16, #tpu.memory_space<vmem>>, vector<784x512xbf16>
    %cst = arith.constant dense<0.000000e+00> : vector<16x512xf32>
    %3 = tpu.matmul %1, %2, %cst {dimension_numbers = #tpu.dot_dimension_numbers<[1], [0], [0], [1], [0, 0, 1, 1], [], []>} : vector<16x784xbf16>, vector<784x512xbf16>, vector<16x512xf32> -> vector<16x512xf32>
    %c0_3 = arith.constant 0 : index
    %c0_4 = arith.constant 0 : index
    %4 = vector.load %arg3[%c0_3, %c0_4] : memref<1x512xf32, #tpu.memory_space<vmem>>, vector<1x512xf32>
    %5 = vector.broadcast %4 : vector<1x512xf32> to vector<16x512xf32>
    %6 = arith.addf %3, %5 : vector<16x512xf32>
    %cst_5 = arith.constant 0.000000e+00 : f32
    %7 = vector.broadcast %cst_5 : f32 to vector<16x512xf32>
    %8 = arith.maximumf %6, %7 : vector<16x512xf32>
    %9 = arith.truncf %8 : vector<16x512xf32> to vector<16x512xbf16>
    %c0_6 = arith.constant 0 : index
    %c0_7 = arith.constant 0 : index
    %10 = vector.load %arg4[%c0_6, %c0_7] : memref<512x256xbf16, #tpu.memory_space<vmem>>, vector<512x256xbf16>
    %cst_8 = arith.constant dense<0.000000e+00> : vector<16x256xf32>
    %11 = tpu.matmul %9, %10, %cst_8 {dimension_numbers = #tpu.dot_dimension_numbers<[1], [0], [0], [1], [0, 0, 1, 1], [], []>} : vector<16x512xbf16>, vector<512x256xbf16>, vector<16x256xf32> -> vector<16x256xf32>
    %c0_9 = arith.constant 0 : index
    %c0_10 = arith.constant 0 : index
    %12 = vector.load %arg5[%c0_9, %c0_10] : memref<1x256xf32, #tpu.memory_space<vmem>>, vector<1x256xf32>
    %13 = vector.broadcast %12 : vector<1x256xf32> to vector<16x256xf32>
    %14 = arith.addf %11, %13 : vector<16x256xf32>
    %cst_11 = arith.constant 0.000000e+00 : f32
    %15 = vector.broadcast %cst_11 : f32 to vector<16x256xf32>
    %16 = arith.maximumf %14, %15 : vector<16x256xf32>
    %17 = arith.truncf %16 : vector<16x256xf32> to vector<16x256xbf16>
    %c0_12 = arith.constant 0 : index
    %c0_13 = arith.constant 0 : index
    %18 = vector.load %arg6[%c0_12, %c0_13] : memref<256x128xbf16, #tpu.memory_space<vmem>>, vector<256x128xbf16>
    %cst_14 = arith.constant dense<0.000000e+00> : vector<16x128xf32>
    %19 = tpu.matmul %17, %18, %cst_14 {dimension_numbers = #tpu.dot_dimension_numbers<[1], [0], [0], [1], [0, 0, 1, 1], [], []>} : vector<16x256xbf16>, vector<256x128xbf16>, vector<16x128xf32> -> vector<16x128xf32>
    %c0_15 = arith.constant 0 : index
    %c0_16 = arith.constant 0 : index
    %20 = vector.load %arg7[%c0_15, %c0_16] : memref<1x128xf32, #tpu.memory_space<vmem>>, vector<1x128xf32>
    %21 = vector.broadcast %20 : vector<1x128xf32> to vector<16x128xf32>
    %22 = arith.addf %19, %21 : vector<16x128xf32>
    %cst_17 = arith.constant 0.000000e+00 : f32
    %23 = vector.broadcast %cst_17 : f32 to vector<16x128xf32>
    %24 = arith.maximumf %22, %23 : vector<16x128xf32>
    %25 = arith.truncf %24 : vector<16x128xf32> to vector<16x128xbf16>
    %c0_18 = arith.constant 0 : index
    %c0_19 = arith.constant 0 : index
    %26 = vector.load %arg8[%c0_18, %c0_19] : memref<128x128xbf16, #tpu.memory_space<vmem>>, vector<128x128xbf16>
    %cst_20 = arith.constant dense<0.000000e+00> : vector<16x128xf32>
    %27 = tpu.matmul %25, %26, %cst_20 {dimension_numbers = #tpu.dot_dimension_numbers<[1], [0], [0], [1], [0, 0, 1, 1], [], []>} : vector<16x128xbf16>, vector<128x128xbf16>, vector<16x128xf32> -> vector<16x128xf32>
    %c0_21 = arith.constant 0 : index
    %c0_22 = arith.constant 0 : index
    %28 = vector.load %arg9[%c0_21, %c0_22] : memref<1x128xf32, #tpu.memory_space<vmem>>, vector<1x128xf32>
    %29 = vector.broadcast %28 : vector<1x128xf32> to vector<16x128xf32>
    %30 = arith.addf %27, %29 : vector<16x128xf32>
    %cst_23 = arith.constant 0.000000e+00 : f32
    %31 = vector.broadcast %cst_23 : f32 to vector<16x128xf32>
    %32 = arith.maximumf %30, %31 : vector<16x128xf32>
    %33 = arith.truncf %32 : vector<16x128xf32> to vector<16x128xbf16>
    %c0_24 = arith.constant 0 : index
    %c0_25 = arith.constant 0 : index
    %34 = vector.load %arg10[%c0_24, %c0_25] : memref<128x128xbf16, #tpu.memory_space<vmem>>, vector<128x128xbf16>
    %cst_26 = arith.constant dense<0.000000e+00> : vector<16x128xf32>
    %35 = tpu.matmul %33, %34, %cst_26 {dimension_numbers = #tpu.dot_dimension_numbers<[1], [0], [0], [1], [0, 0, 1, 1], [], []>} : vector<16x128xbf16>, vector<128x128xbf16>, vector<16x128xf32> -> vector<16x128xf32>
    %c0_27 = arith.constant 0 : index
    %c0_28 = arith.constant 0 : index
    %36 = vector.load %arg11[%c0_27, %c0_28] : memref<1x128xf32, #tpu.memory_space<vmem>>, vector<1x128xf32>
    %37 = vector.broadcast %36 : vector<1x128xf32> to vector<16x128xf32>
    %38 = arith.addf %35, %37 : vector<16x128xf32>
    %cst_29 = arith.constant 0.000000e+00 : f32
    %39 = vector.broadcast %cst_29 : f32 to vector<16x128xf32>
    %40 = arith.maximumf %38, %39 : vector<16x128xf32>
    %41 = arith.truncf %40 : vector<16x128xf32> to vector<16x128xbf16>
    %c0_30 = arith.constant 0 : index
    %c0_31 = arith.constant 0 : index
    %42 = vector.load %arg12[%c0_30, %c0_31] : memref<128x128xbf16, #tpu.memory_space<vmem>>, vector<128x128xbf16>
    %cst_32 = arith.constant dense<0.000000e+00> : vector<16x128xf32>
    %43 = tpu.matmul %41, %42, %cst_32 {dimension_numbers = #tpu.dot_dimension_numbers<[1], [0], [0], [1], [0, 0, 1, 1], [], []>} : vector<16x128xbf16>, vector<128x128xbf16>, vector<16x128xf32> -> vector<16x128xf32>
    %c0_33 = arith.constant 0 : index
    %c0_34 = arith.constant 0 : index
    %44 = vector.load %arg13[%c0_33, %c0_34] : memref<1x128xf32, #tpu.memory_space<vmem>>, vector<1x128xf32>
    %45 = vector.broadcast %44 : vector<1x128xf32> to vector<16x128xf32>
    %46 = arith.addf %43, %45 : vector<16x128xf32>
    %cst_35 = arith.constant dense<0xFF800000> : vector<16xf32>
    %47 = vector.multi_reduction <maximumf>, %46, %cst_35 [1] : vector<16x128xf32> to vector<16xf32>
    %48 = vector.shape_cast %47 : vector<16xf32> to vector<16x1xf32>
    %49 = vector.broadcast %48 : vector<16x1xf32> to vector<16x128xf32>
    %50 = arith.subf %46, %49 : vector<16x128xf32>
    %51 = math.exp %50 : vector<16x128xf32>
    %cst_36 = arith.constant dense<0.000000e+00> : vector<16xf32>
    %52 = vector.multi_reduction <add>, %51, %cst_36 [1] : vector<16x128xf32> to vector<16xf32>
    %53 = vector.shape_cast %52 : vector<16xf32> to vector<16x1xf32>
    %54 = math.log %53 : vector<16x1xf32>
    %55 = vector.broadcast %54 : vector<16x1xf32> to vector<16x128xf32>
    %56 = arith.subf %50, %55 : vector<16x128xf32>
    %c0_37 = arith.constant 0 : index
    %c0_38 = arith.constant 0 : index
    %57 = vector.load %arg14[%c0_37, %c0_38] : memref<16x128xf32, #tpu.memory_space<vmem>>, vector<16x128xf32>
    tpu.vector_store %arg14[%c0_37, %c0_38], %56 {strides = array<i32>} : memref<16x128xf32, #tpu.memory_space<vmem>>, vector<16x128xf32>,
    return
  }
  func.func @transform_0(%arg0: i32) -> (i32, i32) {
    %c0_i32 = arith.constant 0 : i32
    %c0_i32_0 = arith.constant 0 : i32
    return %arg0, %c0_i32 : i32, i32
  }
  func.func @transform_1(%arg0: i32) -> (i32, i32) {
    %c0_i32 = arith.constant 0 : i32
    %c0_i32_0 = arith.constant 0 : i32
    %c0_i32_1 = arith.constant 0 : i32
    return %c0_i32, %c0_i32_0 : i32, i32
  }
  func.func @transform_2(%arg0: i32) -> (i32, i32) {
    %c0_i32 = arith.constant 0 : i32
    %c0_i32_0 = arith.constant 0 : i32
    %c0_i32_1 = arith.constant 0 : i32
    return %c0_i32, %c0_i32_0 : i32, i32
  }
  func.func @transform_3(%arg0: i32) -> (i32, i32) {
    %c0_i32 = arith.constant 0 : i32
    %c0_i32_0 = arith.constant 0 : i32
    %c0_i32_1 = arith.constant 0 : i32
    return %c0_i32, %c0_i32_0 : i32, i32
  }
  func.func @transform_4(%arg0: i32) -> (i32, i32) {
    %c0_i32 = arith.constant 0 : i32
    %c0_i32_0 = arith.constant 0 : i32
    %c0_i32_1 = arith.constant 0 : i32
    return %c0_i32, %c0_i32_0 : i32, i32
  }
  func.func @transform_5(%arg0: i32) -> (i32, i32) {
    %c0_i32 = arith.constant 0 : i32
    %c0_i32_0 = arith.constant 0 : i32
    %c0_i32_1 = arith.constant 0 : i32
    return %c0_i32, %c0_i32_0 : i32, i32
  }
  func.func @transform_6(%arg0: i32) -> (i32, i32) {
    %c0_i32 = arith.constant 0 : i32
    %c0_i32_0 = arith.constant 0 : i32
    %c0_i32_1 = arith.constant 0 : i32
    return %c0_i32, %c0_i32_0 : i32, i32
  }
  func.func @transform_7(%arg0: i32) -> (i32, i32) {
    %c0_i32 = arith.constant 0 : i32
    %c0_i32_0 = arith.constant 0 : i32
    %c0_i32_1 = arith.constant 0 : i32
    return %c0_i32, %c0_i32_0 : i32, i32
  }
  func.func @transform_8(%arg0: i32) -> (i32, i32) {
    %c0_i32 = arith.constant 0 : i32
    %c0_i32_0 = arith.constant 0 : i32
    %c0_i32_1 = arith.constant 0 : i32
    return %c0_i32, %c0_i32_0 : i32, i32
  }
  func.func @transform_9(%arg0: i32) -> (i32, i32) {
    %c0_i32 = arith.constant 0 : i32
    %c0_i32_0 = arith.constant 0 : i32
    %c0_i32_1 = arith.constant 0 : i32
    return %c0_i32, %c0_i32_0 : i32, i32
  }
  func.func @transform_10(%arg0: i32) -> (i32, i32) {
    %c0_i32 = arith.constant 0 : i32
    %c0_i32_0 = arith.constant 0 : i32
    %c0_i32_1 = arith.constant 0 : i32
    return %c0_i32, %c0_i32_0 : i32, i32
  }
  func.func @transform_11(%arg0: i32) -> (i32, i32) {
    %c0_i32 = arith.constant 0 : i32
    %c0_i32_0 = arith.constant 0 : i32
    %c0_i32_1 = arith.constant 0 : i32
    return %c0_i32, %c0_i32_0 : i32, i32
  }
  func.func @transform_12(%arg0: i32) -> (i32, i32) {
    %c0_i32 = arith.constant 0 : i32
    %c0_i32_0 = arith.constant 0 : i32
    %c0_i32_1 = arith.constant 0 : i32
    return %c0_i32, %c0_i32_0 : i32, i32
  }
  func.func @transform_13(%arg0: i32) -> (i32, i32) {
    %c0_i32 = arith.constant 0 : i32
    %c0_i32_0 = arith.constant 0 : i32
    return %arg0, %c0_i32 : i32, i32
  }
}

</mosaic_0001>

<llo_original>
// kernel: tpu_custom_call.1
$region0: #{tpu_custom_call.1}
  #allocation0 [shape = 'u32[]', space=smem, size = 0x4, offset = 0x4, fixed_abs, tag = 'smem constant byte address 0x4 - core index']
  #allocation1 [shape = 'u32[144,128]{1,0:T(1,128)}', space=vmem, size = 0x12000, scoped, tag = 'internal scratch']
  %s0 = inlined_call_operand.hbm [shape: f32[16,784], index: 0, kind: input, shape index: {}]
  %s1 = inlined_call_operand.hbm [shape: bf16[784,512], index: 1, kind: input, shape index: {}]
  %s2 = inlined_call_operand.vmem [shape: f32[1,512], index: 2, kind: input, shape index: {}]
  %s3 = inlined_call_operand.hbm [shape: bf16[512,256], index: 3, kind: input, shape index: {}]
  %s4 = inlined_call_operand.vmem [shape: f32[1,256], index: 4, kind: input, shape index: {}]
  %s5 = inlined_call_operand.hbm [shape: bf16[256,128], index: 5, kind: input, shape index: {}]
  %s6 = inlined_call_operand.vmem [shape: f32[1,128], index: 6, kind: input, shape index: {}]
  %s7 = inlined_call_operand.hbm [shape: bf16[128,128], index: 7, kind: input, shape index: {}]
  %s8 = inlined_call_operand.vmem [shape: f32[1,128], index: 8, kind: input, shape index: {}]
  %s9 = inlined_call_operand.hbm [shape: bf16[128,128], index: 9, kind: input, shape index: {}]
  %s10 = inlined_call_operand.vmem [shape: f32[1,128], index: 10, kind: input, shape index: {}]
  %s11 = inlined_call_operand.hbm [shape: bf16[128,128], index: 11, kind: input, shape index: {}]
  %s12 = inlined_call_operand.vmem [shape: f32[1,128], index: 12, kind: input, shape index: {}]
  %s13 = inlined_call_operand.hbm [shape: f32[16,128], index: 13, kind: output, shape index: {}]
  %s14 = sld [smem:[#allocation0]]
  $region90: #{tpu_custom_call.1} parent=0
    _
  %s16 = ssub.s32 1, %s14
  %s17 = scalar_select 0, %s16, %s14
  $region1: #{tpu_custom_call.1} parent=0
    #allocation2 [shape = 'u8[57344]{0}', space=vmem, size = 0xe000, scoped, tag = 'input window, operand 0, single buffered']
    #allocation3 [shape = 's32[1]{0}', space=sflag, size = 0x4, scoped, tag = 'scoped memory for tpu_custom_call.1']
    #allocation4 [shape = 's32[1]{0}', space=sflag, size = 0x4, scoped, tag = 'scoped memory for tpu_custom_call.1']
    #allocation5 [shape = 'u8[802816]{0}', space=vmem, size = 0xc4000, scoped, tag = 'input window, operand 1, single buffered']
    #allocation6 [shape = 's32[1]{0}', space=sflag, size = 0x4, scoped, tag = 'scoped memory for tpu_custom_call.1']
    #allocation7 [shape = 'u8[262144]{0}', space=vmem, size = 0x40000, scoped, tag = 'input window, operand 3, single buffered']
    #allocation8 [shape = 'u8[65536]{0}', space=vmem, size = 0x10000, scoped, tag = 'input window, operand 5, single buffered']
    #allocation9 [shape = 's32[1]{0}', space=sflag, size = 0x4, scoped, tag = 'scoped memory for tpu_custom_call.1']
    #allocation10 [shape = 'u8[32768]{0}', space=vmem, size = 0x8000, scoped, tag = 'input window, operand 7, single buffered']
    #allocation11 [shape = 'u8[32768]{0}', space=vmem, size = 0x8000, scoped, tag = 'input window, operand 9, single buffered']
    #allocation12 [shape = 's32[1]{0}', space=sflag, size = 0x4, scoped, tag = 'scoped memory for tpu_custom_call.1']
    #allocation13 [shape = 'u8[32768]{0}', space=vmem, size = 0x8000, scoped, tag = 'input window, operand 11, single buffered']
    #allocation14 [shape = 'u8[8192]{0}', space=vmem, size = 0x2000, scoped, tag = 'output window, operand 0, single buffered']
    %18 = vsyncpa [#allocation3], 0
    %19 = vsyncpa [#allocation6], 0
    %20 = vsyncpa [#allocation9], 0
    %21 = vsyncpa [#allocation12], 0
    %22 = vsyncpa [#allocation4], 0
    // Predicated region
    $region2: #{tpu_custom_call.1} parent=1 // pred_check
      _
    $region3: #{tpu_custom_call.1} parent=1 // pred_check_branch
      %24 = sbr.rel (0) target = $region5
    $region4: #{tpu_custom_call.1} parent=1 // pred_region
      %s26 = ssub.s32 1792, 1792
      %27 = vsyncadd [#allocation3], %s26
      %s28 = sshll.u32 [#allocation2], 4
      %s29 = int_to_ptr.vmem [resolvable:$true] %s28
      %34 = dma.hbm_to_vmem [thread:$0]  %s0, 1792, %s29, [#allocation3], 896, 896, 56
    $region5: #{tpu_custom_call.1} parent=1 // pred_fallthru
      _
    // Predicated region
    $region6: #{tpu_custom_call.1} parent=1 // pred_check
      _
    $region7: #{tpu_custom_call.1} parent=1 // pred_check_branch
      %36 = sbr.rel (0) target = $region9
    $region8: #{tpu_custom_call.1} parent=1 // pred_region
      %s38 = ssub.s32 25088, 25088
      %39 = vsyncadd [#allocation6], %s38
      %s40 = sshll.u32 [#allocation5], 4
      %s41 = int_to_ptr.vmem [resolvable:$true] %s40
      %46 = dma.hbm_to_vmem [thread:$0]  %s1, 25088, %s41, [#allocation6], 256, 256, 16
    $region9: #{tpu_custom_call.1} parent=1 // pred_fallthru
      _
    // Predicated region
    $region10: #{tpu_custom_call.1} parent=1 // pred_check
      _
    $region11: #{tpu_custom_call.1} parent=1 // pred_check_branch
      %48 = sbr.rel (0) target = $region13
    $region12: #{tpu_custom_call.1} parent=1 // pred_region
      _
    $region13: #{tpu_custom_call.1} parent=1 // pred_fallthru
      _
    // Predicated region
    $region14: #{tpu_custom_call.1} parent=1 // pred_check
      _
    $region15: #{tpu_custom_call.1} parent=1 // pred_check_branch
      %50 = sbr.rel (0) target = $region17
    $region16: #{tpu_custom_call.1} parent=1 // pred_region
      %s52 = ssub.s32 8192, 8192
      %53 = vsyncadd [#allocation6], %s52
      %s54 = sshll.u32 [#allocation7], 4
      %s55 = int_to_ptr.vmem [resolvable:$true] %s54
      %60 = dma.hbm_to_vmem [thread:$0]  %s3, 8192, %s55, [#allocation6], 128, 128, 8
    $region17: #{tpu_custom_call.1} parent=1 // pred_fallthru
      _
    // Predicated region
    $region18: #{tpu_custom_call.1} parent=1 // pred_check
      _
    $region19: #{tpu_custom_call.1} parent=1 // pred_check_branch
      %62 = sbr.rel (0) target = $region21
    $region20: #{tpu_custom_call.1} parent=1 // pred_region
      _
    $region21: #{tpu_custom_call.1} parent=1 // pred_fallthru
      _
    // Predicated region
    $region22: #{tpu_custom_call.1} parent=1 // pred_check
      _
    $region23: #{tpu_custom_call.1} parent=1 // pred_check_branch
      %64 = sbr.rel (0) target = $region25
    $region24: #{tpu_custom_call.1} parent=1 // pred_region
      %s66 = ssub.s32 2048, 2048
      %67 = vsyncadd [#allocation9], %s66
      %s68 = sshll.u32 [#allocation8], 4
      %s69 = int_to_ptr.vmem [resolvable:$true] %s68
      %74 = dma.hbm_to_vmem [thread:$0]  %s5, 2048, %s69, [#allocation9], 64, 64, 4
    $region25: #{tpu_custom_call.1} parent=1 // pred_fallthru
      _
    // Predicated region
    $region26: #{tpu_custom_call.1} parent=1 // pred_check
      _
    $region27: #{tpu_custom_call.1} parent=1 // pred_check_branch
      %76 = sbr.rel (0) target = $region29
    $region28: #{tpu_custom_call.1} parent=1 // pred_region
      _
    $region29: #{tpu_custom_call.1} parent=1 // pred_fallthru
      _
    // Predicated region
    $region30: #{tpu_custom_call.1} parent=1 // pred_check
      _
    $region31: #{tpu_custom_call.1} parent=1 // pred_check_branch
      %78 = sbr.rel (0) target = $region33
    $region32: #{tpu_custom_call.1} parent=1 // pred_region
      %s80 = ssub.s32 1024, 1024
      %81 = vsyncadd [#allocation9], %s80
      %s82 = sshll.u32 [#allocation10], 4
      %s83 = int_to_ptr.vmem [resolvable:$true] %s82
      %88 = dma.hbm_to_vmem [thread:$0]  %s7, 1024, %s83, [#allocation9], 64, 64, 4
    $region33: #{tpu_custom_call.1} parent=1 // pred_fallthru
      _
    // Predicated region
    $region34: #{tpu_custom_call.1} parent=1 // pred_check
      _
    $region35: #{tpu_custom_call.1} parent=1 // pred_check_branch
      %90 = sbr.rel (0) target = $region37
    $region36: #{tpu_custom_call.1} parent=1 // pred_region
      _
    $region37: #{tpu_custom_call.1} parent=1 // pred_fallthru
      _
    // Predicated region
    $region38: #{tpu_custom_call.1} parent=1 // pred_check
      _
    $region39: #{tpu_custom_call.1} parent=1 // pred_check_branch
      %92 = sbr.rel (0) target = $region41
    $region40: #{tpu_custom_call.1} parent=1 // pred_region
      %s94 = ssub.s32 1024, 1024
      %95 = vsyncadd [#allocation12], %s94
      %s96 = sshll.u32 [#allocation11], 4
      %s97 = int_to_ptr.vmem [resolvable:$true] %s96
      %102 = dma.hbm_to_vmem [thread:$0]  %s9, 1024, %s97, [#allocation12], 64, 64, 4
    $region41: #{tpu_custom_call.1} parent=1 // pred_fallthru
      _
    // Predicated region
    $region42: #{tpu_custom_call.1} parent=1 // pred_check
      _
    $region43: #{tpu_custom_call.1} parent=1 // pred_check_branch
      %104 = sbr.rel (0) target = $region45
    $region44: #{tpu_custom_call.1} parent=1 // pred_region
      _
    $region45: #{tpu_custom_call.1} parent=1 // pred_fallthru
      _
    // Predicated region
    $region46: #{tpu_custom_call.1} parent=1 // pred_check
      _
    $region47: #{tpu_custom_call.1} parent=1 // pred_check_branch
      %106 = sbr.rel (0) target = $region49
    $region48: #{tpu_custom_call.1} parent=1 // pred_region
      %s108 = ssub.s32 1024, 1024
      %109 = vsyncadd [#allocation12], %s108
      %s110 = sshll.u32 [#allocation13], 4
      %s111 = int_to_ptr.vmem [resolvable:$true] %s110
      %116 = dma.hbm_to_vmem [thread:$0]  %s11, 1024, %s111, [#allocation12], 64, 64, 4
    $region49: #{tpu_custom_call.1} parent=1 // pred_fallthru
      _
    // Predicated region
    $region50: #{tpu_custom_call.1} parent=1 // pred_check
      _
    $region51: #{tpu_custom_call.1} parent=1 // pred_check_branch
      %118 = sbr.rel (0) target = $region53
    $region52: #{tpu_custom_call.1} parent=1 // pred_region
      _
    $region53: #{tpu_custom_call.1} parent=1 // pred_fallthru
      _
    // Predicated region
    $region54: #{tpu_custom_call.1} parent=1 // pred_check
      _
    $region55: #{tpu_custom_call.1} parent=1 // pred_check_branch
      %120 = sbr.rel (0) target = $region57
    $region56: #{tpu_custom_call.1} parent=1 // pred_region
      %121 = dma.done [#allocation3], 1792
    $region57: #{tpu_custom_call.1} parent=1 // pred_fallthru
      _
    // Predicated region
    $region58: #{tpu_custom_call.1} parent=1 // pred_check
      _
    $region59: #{tpu_custom_call.1} parent=1 // pred_check_branch
      %123 = sbr.rel (0) target = $region61
    $region60: #{tpu_custom_call.1} parent=1 // pred_region
      %124 = dma.done [#allocation6], 25088
    $region61: #{tpu_custom_call.1} parent=1 // pred_fallthru
      _
    // Predicated region
    $region62: #{tpu_custom_call.1} parent=1 // pred_check
      _
    $region63: #{tpu_custom_call.1} parent=1 // pred_check_branch
      %126 = sbr.rel (0) target = $region65
    $region64: #{tpu_custom_call.1} parent=1 // pred_region
      %127 = dma.done [#allocation6], 8192
    $region65: #{tpu_custom_call.1} parent=1 // pred_fallthru
      _
    // Predicated region
    $region66: #{tpu_custom_call.1} parent=1 // pred_check
      _
    $region67: #{tpu_custom_call.1} parent=1 // pred_check_branch
      %129 = sbr.rel (0) target = $region69
    $region68: #{tpu_custom_call.1} parent=1 // pred_region
      %130 = dma.done [#allocation9], 2048
    $region69: #{tpu_custom_call.1} parent=1 // pred_fallthru
      _
    // Predicated region
    $region70: #{tpu_custom_call.1} parent=1 // pred_check
      _
    $region71: #{tpu_custom_call.1} parent=1 // pred_check_branch
      %132 = sbr.rel (0) target = $region73
    $region72: #{tpu_custom_call.1} parent=1 // pred_region
      %133 = dma.done [#allocation9], 1024
    $region73: #{tpu_custom_call.1} parent=1 // pred_fallthru
      _
    // Predicated region
    $region74: #{tpu_custom_call.1} parent=1 // pred_check
      _
    $region75: #{tpu_custom_call.1} parent=1 // pred_check_branch
      %135 = sbr.rel (0) target = $region77
    $region76: #{tpu_custom_call.1} parent=1 // pred_region
      %136 = dma.done [#allocation12], 1024
    $region77: #{tpu_custom_call.1} parent=1 // pred_fallthru
      _
    // Predicated region
    $region78: #{tpu_custom_call.1} parent=1 // pred_check
      _
    $region79: #{tpu_custom_call.1} parent=1 // pred_check_branch
      %138 = sbr.rel (0) target = $region81
    $region80: #{tpu_custom_call.1} parent=1 // pred_region
      %139 = dma.done [#allocation12], 1024
    $region81: #{tpu_custom_call.1} parent=1 // pred_fallthru
      _
    %v141 = vld [vmem:[#allocation2] sm:$0xff]
    %v142 = vld [vmem:[#allocation2 + $0x8] sm:$0xff]
    %v143 = vld [vmem:[#allocation2 + $0x10] sm:$0xff]
    %v144 = vld [vmem:[#allocation2 + $0x18] sm:$0xff]
    %v145 = vld [vmem:[#allocation2 + $0x20] sm:$0xff]
    %v146 = vld [vmem:[#allocation2 + $0x28] sm:$0xff]
    %v147 = vld [vmem:[#allocation2 + $0x30] sm:$0xff]
    %v148 = vld [vmem:[#allocation2 + $0x38] sm:$0xff]
    %v149 = vld [vmem:[#allocation2 + $0x40] sm:$0xff]
    %v150 = vld [vmem:[#allocation2 + $0x48] sm:$0xff]
    %v151 = vld [vmem:[#allocation2 + $0x50] sm:$0xff]
    %v152 = vld [vmem:[#allocation2 + $0x58] sm:$0xff]
    %v153 = vld [vmem:[#allocation2 + $0x60] sm:$0xff]
    %v154 = vld [vmem:[#allocation2 + $0x68] sm:$0xff]
    %v155 = vpack.c.bf16 %v148, %v141
    %v156 = vpack.c.bf16 %v149, %v142
    %v157 = vpack.c.bf16 %v150, %v143
    %v158 = vpack.c.bf16 %v151, %v144
    %v159 = vpack.c.bf16 %v152, %v145
    %v160 = vpack.c.bf16 %v153, %v146
    %v161 = vpack.c.bf16 %v154, %v147
    %v162 = vld [vmem:[#allocation5] sm:$0xff]
    %v163 = vld [vmem:[#allocation5 + $0x8] sm:$0xff]
    %v164 = vld [vmem:[#allocation5 + $0x10] sm:$0xff]
    %v165 = vld [vmem:[#allocation5 + $0x18] sm:$0xff]
    %v166 = vld [vmem:[#allocation5 + $0x20] sm:$0xff]
    %v167 = vld [vmem:[#allocation5 + $0x28] sm:$0xff]
    %v168 = vld [vmem:[#allocation5 + $0x30] sm:$0xff]
    %v169 = vld [vmem:[#allocation5 + $0x38] sm:$0xff]
    %v170 = vld [vmem:[#allocation5 + $0x40] sm:$0xff]
    %v171 = vld [vmem:[#allocation5 + $0x48] sm:$0xff]
    %v172 = vld [vmem:[#allocation5 + $0x50] sm:$0xff]
    %v173 = vld [vmem:[#allocation5 + $0x58] sm:$0xff]
    %v174 = vld [vmem:[#allocation5 + $0x60] sm:$0xff]
    %v175 = vld [vmem:[#allocation5 + $0x68] sm:$0xff]
    %v176 = vld [vmem:[#allocation5 + $0x70] sm:$0xff]
    %v177 = vld [vmem:[#allocation5 + $0x78] sm:$0xff]
    %v178 = vld [vmem:[#allocation5 + $0x80] sm:$0xff]
    %v179 = vld [vmem:[#allocation5 + $0x88] sm:$0xff]
    %v180 = vld [vmem:[#allocation5 + $0x90] sm:$0xff]
    %v181 = vld [vmem:[#allocation5 + $0x98] sm:$0xff]
    %v182 = vld [vmem:[#allocation5 + $0xa0] sm:$0xff]
    %v183 = vld [vmem:[#allocation5 + $0xa8] sm:$0xff]
    %v184 = vld [vmem:[#allocation5 + $0xb0] sm:$0xff]
    %v185 = vld [vmem:[#allocation5 + $0xb8] sm:$0xff]
    %v186 = vld [vmem:[#allocation5 + $0xc0] sm:$0xff]
    %v187 = vld [vmem:[#allocation5 + $0xc8] sm:$0xff]
    %v188 = vld [vmem:[#allocation5 + $0xd0] sm:$0xff]
    %v189 = vld [vmem:[#allocation5 + $0xd8] sm:$0xff]
    %v190 = vld [vmem:[#allocation5 + $0xe0] sm:$0xff]
    %v191 = vld [vmem:[#allocation5 + $0xe8] sm:$0xff]
    %v192 = vld [vmem:[#allocation5 + $0xf0] sm:$0xff]
    %v193 = vld [vmem:[#allocation5 + $0xf8] sm:$0xff]
    %v194 = vld [vmem:[#allocation5 + $0x100] sm:$0xff]
    %v195 = vld [vmem:[#allocation5 + $0x108] sm:$0xff]
    %v196 = vld [vmem:[#allocation5 + $0x110] sm:$0xff]
    %v197 = vld [vmem:[#allocation5 + $0x118] sm:$0xff]
    %v198 = vld [vmem:[#allocation5 + $0x120] sm:$0xff]
    %v199 = vld [vmem:[#allocation5 + $0x128] sm:$0xff]
    %v200 = vld [vmem:[#allocation5 + $0x130] sm:$0xff]
    %v201 = vld [vmem:[#allocation5 + $0x138] sm:$0xff]
    %v202 = vld [vmem:[#allocation5 + $0x140] sm:$0xff]
    %v203 = vld [vmem:[#allocation5 + $0x148] sm:$0xff]
    %v204 = vld [vmem:[#allocation5 + $0x150] sm:$0xff]
    %v205 = vld [vmem:[#allocation5 + $0x158] sm:$0xff]
    %v206 = vld [vmem:[#allocation5 + $0x160] sm:$0xff]
    %v207 = vld [vmem:[#allocation5 + $0x168] sm:$0xff]
    %v208 = vld [vmem:[#allocation5 + $0x170] sm:$0xff]
    %v209 = vld [vmem:[#allocation5 + $0x178] sm:$0xff]
    %v210 = vld [vmem:[#allocation5 + $0x180] sm:$0xff]
    %v211 = vld [vmem:[#allocation5 + $0x188] sm:$0xff]
    %v212 = vld [vmem:[#allocation5 + $0x190] sm:$0xff]
    %v213 = vld [vmem:[#allocation5 + $0x198] sm:$0xff]
    %v214 = vld [vmem:[#allocation5 + $0x1a0] sm:$0xff]
    %v215 = vld [vmem:[#allocation5 + $0x1a8] sm:$0xff]
    %v216 = vld [vmem:[#allocation5 + $0x1b0] sm:$0xff]
    %v217 = vld [vmem:[#allocation5 + $0x1b8] sm:$0xff]
    %v218 = vld [vmem:[#allocation5 + $0x1c0] sm:$0xff]
    %v219 = vld [vmem:[#allocation5 + $0x1c8] sm:$0xff]
    %v220 = vld [vmem:[#allocation5 + $0x1d0] sm:$0xff]
    %v221 = vld [vmem:[#allocation5 + $0x1d8] sm:$0xff]
    %v222 = vld [vmem:[#allocation5 + $0x1e0] sm:$0xff]
    %v223 = vld [vmem:[#allocation5 + $0x1e8] sm:$0xff]
    %v224 = vld [vmem:[#allocation5 + $0x1f0] sm:$0xff]
    %v225 = vld [vmem:[#allocation5 + $0x1f8] sm:$0xff]
    %v226 = vld [vmem:[#allocation5 + $0x200] sm:$0xff]
    %v227 = vld [vmem:[#allocation5 + $0x208] sm:$0xff]
    %v228 = vld [vmem:[#allocation5 + $0x210] sm:$0xff]
    %v229 = vld [vmem:[#allocation5 + $0x218] sm:$0xff]
    %v230 = vld [vmem:[#allocation5 + $0x220] sm:$0xff]
    %v231 = vld [vmem:[#allocation5 + $0x228] sm:$0xff]
    %v232 = vld [vmem:[#allocation5 + $0x230] sm:$0xff]
    %v233 = vld [vmem:[#allocation5 + $0x238] sm:$0xff]
    %v234 = vld [vmem:[#allocation5 + $0x240] sm:$0xff]
    %v235 = vld [vmem:[#allocation5 + $0x248] sm:$0xff]
    %v236 = vld [vmem:[#allocation5 + $0x250] sm:$0xff]
    %v237 = vld [vmem:[#allocation5 + $0x258] sm:$0xff]
    %v238 = vld [vmem:[#allocation5 + $0x260] sm:$0xff]
    %v239 = vld [vmem:[#allocation5 + $0x268] sm:$0xff]
    %v240 = vld [vmem:[#allocation5 + $0x270] sm:$0xff]
    %v241 = vld [vmem:[#allocation5 + $0x278] sm:$0xff]
    %v242 = vld [vmem:[#allocation5 + $0x280] sm:$0xff]
    %v243 = vld [vmem:[#allocation5 + $0x288] sm:$0xff]
    %v244 = vld [vmem:[#allocation5 + $0x290] sm:$0xff]
    %v245 = vld [vmem:[#allocation5 + $0x298] sm:$0xff]
    %v246 = vld [vmem:[#allocation5 + $0x2a0] sm:$0xff]
    %v247 = vld [vmem:[#allocation5 + $0x2a8] sm:$0xff]
    %v248 = vld [vmem:[#allocation5 + $0x2b0] sm:$0xff]
    %v249 = vld [vmem:[#allocation5 + $0x2b8] sm:$0xff]
    %v250 = vld [vmem:[#allocation5 + $0x2c0] sm:$0xff]
    %v251 = vld [vmem:[#allocation5 + $0x2c8] sm:$0xff]
    %v252 = vld [vmem:[#allocation5 + $0x2d0] sm:$0xff]
    %v253 = vld [vmem:[#allocation5 + $0x2d8] sm:$0xff]
    %v254 = vld [vmem:[#allocation5 + $0x2e0] sm:$0xff]
    %v255 = vld [vmem:[#allocation5 + $0x2e8] sm:$0xff]
    %v256 = vld [vmem:[#allocation5 + $0x2f0] sm:$0xff]
    %v257 = vld [vmem:[#allocation5 + $0x2f8] sm:$0xff]
    %v258 = vld [vmem:[#allocation5 + $0x300] sm:$0xff]
    %v259 = vld [vmem:[#allocation5 + $0x308] sm:$0xff]
    %v260 = vld [vmem:[#allocation5 + $0x310] sm:$0xff]
    %v261 = vld [vmem:[#allocation5 + $0x318] sm:$0xff]
    %v262 = vld [vmem:[#allocation5 + $0x320] sm:$0xff]
    %v263 = vld [vmem:[#allocation5 + $0x328] sm:$0xff]
    %v264 = vld [vmem:[#allocation5 + $0x330] sm:$0xff]
    %v265 = vld [vmem:[#allocation5 + $0x338] sm:$0xff]
    %v266 = vld [vmem:[#allocation5 + $0x340] sm:$0xff]
    %v267 = vld [vmem:[#allocation5 + $0x348] sm:$0xff]
    %v268 = vld [vmem:[#allocation5 + $0x350] sm:$0xff]
    %v269 = vld [vmem:[#allocation5 + $0x358] sm:$0xff]
    %v270 = vld [vmem:[#allocation5 + $0x360] sm:$0xff]
    %v271 = vld [vmem:[#allocation5 + $0x368] sm:$0xff]
    %v272 = vld [vmem:[#allocation5 + $0x370] sm:$0xff]
    %v273 = vld [vmem:[#allocation5 + $0x378] sm:$0xff]
    %v274 = vld [vmem:[#allocation5 + $0x380] sm:$0xff]
    %v275 = vld [vmem:[#allocation5 + $0x388] sm:$0xff]
    %v276 = vld [vmem:[#allocation5 + $0x390] sm:$0xff]
    %v277 = vld [vmem:[#allocation5 + $0x398] sm:$0xff]
    %v278 = vld [vmem:[#allocation5 + $0x3a0] sm:$0xff]
    %v279 = vld [vmem:[#allocation5 + $0x3a8] sm:$0xff]
    %v280 = vld [vmem:[#allocation5 + $0x3b0] sm:$0xff]
    %v281 = vld [vmem:[#allocation5 + $0x3b8] sm:$0xff]
    %v282 = vld [vmem:[#allocation5 + $0x3c0] sm:$0xff]
    %v283 = vld [vmem:[#allocation5 + $0x3c8] sm:$0xff]
    %v284 = vld [vmem:[#allocation5 + $0x3d0] sm:$0xff]
    %v285 = vld [vmem:[#allocation5 + $0x3d8] sm:$0xff]
    %v286 = vld [vmem:[#allocation5 + $0x3e0] sm:$0xff]
    %v287 = vld [vmem:[#allocation5 + $0x3e8] sm:$0xff]
    %v288 = vld [vmem:[#allocation5 + $0x3f0] sm:$0xff]
    %v289 = vld [vmem:[#allocation5 + $0x3f8] sm:$0xff]
    %v290 = vld [vmem:[#allocation5 + $0x400] sm:$0xff]
    %v291 = vld [vmem:[#allocation5 + $0x408] sm:$0xff]
    %v292 = vld [vmem:[#allocation5 + $0x410] sm:$0xff]
    %v293 = vld [vmem:[#allocation5 + $0x418] sm:$0xff]
    %v294 = vld [vmem:[#allocation5 + $0x420] sm:$0xff]
    %v295 = vld [vmem:[#allocation5 + $0x428] sm:$0xff]
    %v296 = vld [vmem:[#allocation5 + $0x430] sm:$0xff]
    %v297 = vld [vmem:[#allocation5 + $0x438] sm:$0xff]
    %v298 = vld [vmem:[#allocation5 + $0x440] sm:$0xff]
    %v299 = vld [vmem:[#allocation5 + $0x448] sm:$0xff]
    %v300 = vld [vmem:[#allocation5 + $0x450] sm:$0xff]
    %v301 = vld [vmem:[#allocation5 + $0x458] sm:$0xff]
    %v302 = vld [vmem:[#allocation5 + $0x460] sm:$0xff]
    %v303 = vld [vmem:[#allocation5 + $0x468] sm:$0xff]
    %v304 = vld [vmem:[#allocation5 + $0x470] sm:$0xff]
    %v305 = vld [vmem:[#allocation5 + $0x478] sm:$0xff]
    %v306 = vld [vmem:[#allocation5 + $0x480] sm:$0xff]
    %v307 = vld [vmem:[#allocation5 + $0x488] sm:$0xff]
    %v308 = vld [vmem:[#allocation5 + $0x490] sm:$0xff]
    %v309 = vld [vmem:[#allocation5 + $0x498] sm:$0xff]
    %v310 = vld [vmem:[#allocation5 + $0x4a0] sm:$0xff]
    %v311 = vld [vmem:[#allocation5 + $0x4a8] sm:$0xff]
    %v312 = vld [vmem:[#allocation5 + $0x4b0] sm:$0xff]
    %v313 = vld [vmem:[#allocation5 + $0x4b8] sm:$0xff]
    %v314 = vld [vmem:[#allocation5 + $0x4c0] sm:$0xff]
    %v315 = vld [vmem:[#allocation5 + $0x4c8] sm:$0xff]
    %v316 = vld [vmem:[#allocation5 + $0x4d0] sm:$0xff]
    %v317 = vld [vmem:[#allocation5 + $0x4d8] sm:$0xff]
    %v318 = vld [vmem:[#allocation5 + $0x4e0] sm:$0xff]
    %v319 = vld [vmem:[#allocation5 + $0x4e8] sm:$0xff]
    %v320 = vld [vmem:[#allocation5 + $0x4f0] sm:$0xff]
    %v321 = vld [vmem:[#allocation5 + $0x4f8] sm:$0xff]
    %v322 = vld [vmem:[#allocation5 + $0x500] sm:$0xff]
    %v323 = vld [vmem:[#allocation5 + $0x508] sm:$0xff]
    %v324 = vld [vmem:[#allocation5 + $0x510] sm:$0xff]
    %v325 = vld [vmem:[#allocation5 + $0x518] sm:$0xff]
    %v326 = vld [vmem:[#allocation5 + $0x520] sm:$0xff]
    %v327 = vld [vmem:[#allocation5 + $0x528] sm:$0xff]
    %v328 = vld [vmem:[#allocation5 + $0x530] sm:$0xff]
    %v329 = vld [vmem:[#allocation5 + $0x538] sm:$0xff]
    %v330 = vld [vmem:[#allocation5 + $0x540] sm:$0xff]
    %v331 = vld [vmem:[#allocation5 + $0x548] sm:$0xff]
    %v332 = vld [vmem:[#allocation5 + $0x550] sm:$0xff]
    %v333 = vld [vmem:[#allocation5 + $0x558] sm:$0xff]
    %v334 = vld [vmem:[#allocation5 + $0x560] sm:$0xff]
    %v335 = vld [vmem:[#allocation5 + $0x568] sm:$0xff]
    %v336 = vld [vmem:[#allocation5 + $0x570] sm:$0xff]
    %v337 = vld [vmem:[#allocation5 + $0x578] sm:$0xff]
    %v338 = vld [vmem:[#allocation5 + $0x580] sm:$0xff]
    %v339 = vld [vmem:[#allocation5 + $0x588] sm:$0xff]
    %v340 = vld [vmem:[#allocation5 + $0x590] sm:$0xff]
    %v341 = vld [vmem:[#allocation5 + $0x598] sm:$0xff]
    %v342 = vld [vmem:[#allocation5 + $0x5a0] sm:$0xff]
    %v343 = vld [vmem:[#allocation5 + $0x5a8] sm:$0xff]
    %v344 = vld [vmem:[#allocation5 + $0x5b0] sm:$0xff]
    %v345 = vld [vmem:[#allocation5 + $0x5b8] sm:$0xff]
    %v346 = vld [vmem:[#allocation5 + $0x5c0] sm:$0xff]
    %v347 = vld [vmem:[#allocation5 + $0x5c8] sm:$0xff]
    %v348 = vld [vmem:[#allocation5 + $0x5d0] sm:$0xff]
    %v349 = vld [vmem:[#allocation5 + $0x5d8] sm:$0xff]
    %v350 = vld [vmem:[#allocation5 + $0x5e0] sm:$0xff]
    %v351 = vld [vmem:[#allocation5 + $0x5e8] sm:$0xff]
    %v352 = vld [vmem:[#allocation5 + $0x5f0] sm:$0xff]
    %v353 = vld [vmem:[#allocation5 + $0x5f8] sm:$0xff]
    %v354 = vld [vmem:[#allocation5 + $0x600] sm:$0xff]
    %v355 = vld [vmem:[#allocation5 + $0x608] sm:$0xff]
    %v356 = vld [vmem:[#allocation5 + $0x610] sm:$0xff]
    %v357 = vld [vmem:[#allocation5 + $0x618] sm:$0xff]
    %v358 = vld [vmem:[%s2] sm:$0xf]
    %v360 = vlaneseq
    %v361 = vshrl.u32 %v360, 7
    %v362 = vsub.s32 0, %v361
    %v363 = vrot.slane %v358, %v362
    %v364 = vlaneseq
    %v365 = vshrl.u32 %v364, 7
    %v366 = vsub.s32 1, %v365
    %v367 = vrot.slane %v358, %v366
    %v368 = vlaneseq
    %v369 = vshrl.u32 %v368, 7
    %v370 = vsub.s32 2, %v369
    %v371 = vrot.slane %v358, %v370
    %v372 = vlaneseq
    %v373 = vshrl.u32 %v372, 7
    %v374 = vsub.s32 3, %v373
    %v375 = vrot.slane %v358, %v374
    %v576 = vunpack.c.l.b16 %v162
    %v577 = vunpack.c.h.b16 %v162
    %v578 = vunpack.c.l.b16 %v163
    %v579 = vunpack.c.h.b16 %v163
    %v580 = vunpack.c.l.b16 %v164
    %v581 = vunpack.c.h.b16 %v164
    %v582 = vunpack.c.l.b16 %v165
    %v583 = vunpack.c.h.b16 %v165
    %v584 = vunpack.c.l.b16 %v166
    %v585 = vunpack.c.h.b16 %v166
    %v586 = vunpack.c.l.b16 %v167
    %v587 = vunpack.c.h.b16 %v167
    %v588 = vunpack.c.l.b16 %v168
    %v589 = vunpack.c.h.b16 %v168
    %v590 = vunpack.c.l.b16 %v169
    %v591 = vunpack.c.h.b16 %v169
    %v592 = vunpack.c.l.b16 %v170
    %v593 = vunpack.c.h.b16 %v170
    %v594 = vunpack.c.l.b16 %v171
    %v595 = vunpack.c.h.b16 %v171
    %v596 = vunpack.c.l.b16 %v172
    %v597 = vunpack.c.h.b16 %v172
    %v598 = vunpack.c.l.b16 %v173
    %v599 = vunpack.c.h.b16 %v173
    %v600 = vunpack.c.l.b16 %v174
    %v601 = vunpack.c.h.b16 %v174
    %v602 = vunpack.c.l.b16 %v175
    %v603 = vunpack.c.h.b16 %v175
    %v604 = vunpack.c.l.b16 %v176
    %v605 = vunpack.c.h.b16 %v176
    %v606 = vunpack.c.l.b16 %v177
    %v607 = vunpack.c.h.b16 %v177
    %v608 = vunpack.c.l.b16 %v178
    %v609 = vunpack.c.h.b16 %v178
    %v610 = vunpack.c.l.b16 %v179
    %v611 = vunpack.c.h.b16 %v179
    %v612 = vunpack.c.l.b16 %v180
    %v613 = vunpack.c.h.b16 %v180
    %v614 = vunpack.c.l.b16 %v181
    %v615 = vunpack.c.h.b16 %v181
    %v616 = vunpack.c.l.b16 %v182
    %v617 = vunpack.c.h.b16 %v182
    %v618 = vunpack.c.l.b16 %v183
    %v619 = vunpack.c.h.b16 %v183
    %v620 = vunpack.c.l.b16 %v184
    %v621 = vunpack.c.h.b16 %v184
    %v622 = vunpack.c.l.b16 %v185
    %v623 = vunpack.c.h.b16 %v185
    %v624 = vunpack.c.l.b16 %v186
    %v625 = vunpack.c.h.b16 %v186
    %v626 = vunpack.c.l.b16 %v187
    %v627 = vunpack.c.h.b16 %v187
    %v628 = vunpack.c.l.b16 %v188
    %v629 = vunpack.c.h.b16 %v188
    %v630 = vunpack.c.l.b16 %v189
    %v631 = vunpack.c.h.b16 %v189
    %v632 = vunpack.c.l.b16 %v190
    %v633 = vunpack.c.h.b16 %v190
    %v634 = vunpack.c.l.b16 %v191
    %v635 = vunpack.c.h.b16 %v191
    %v636 = vunpack.c.l.b16 %v192
    %v637 = vunpack.c.h.b16 %v192
    %v638 = vunpack.c.l.b16 %v193
    %v639 = vunpack.c.h.b16 %v193
    %v640 = vunpack.c.l.b16 %v194
    %v641 = vunpack.c.h.b16 %v194
    %v642 = vunpack.c.l.b16 %v195
    %v643 = vunpack.c.h.b16 %v195
    %v644 = vunpack.c.l.b16 %v196
    %v645 = vunpack.c.h.b16 %v196
    %v646 = vunpack.c.l.b16 %v197
    %v647 = vunpack.c.h.b16 %v197
    %v648 = vunpack.c.l.b16 %v198
    %v649 = vunpack.c.h.b16 %v198
    %v650 = vunpack.c.l.b16 %v199
    %v651 = vunpack.c.h.b16 %v199
    %v652 = vunpack.c.l.b16 %v200
    %v653 = vunpack.c.h.b16 %v200
    %v654 = vunpack.c.l.b16 %v201
    %v655 = vunpack.c.h.b16 %v201
    %v656 = vunpack.c.l.b16 %v202
    %v657 = vunpack.c.h.b16 %v202
    %v658 = vunpack.c.l.b16 %v203
    %v659 = vunpack.c.h.b16 %v203
    %v660 = vunpack.c.l.b16 %v204
    %v661 = vunpack.c.h.b16 %v204
    %v662 = vunpack.c.l.b16 %v205
    %v663 = vunpack.c.h.b16 %v205
    %v664 = vunpack.c.l.b16 %v206
    %v665 = vunpack.c.h.b16 %v206
    %v666 = vunpack.c.l.b16 %v207
    %v667 = vunpack.c.h.b16 %v207
    %v668 = vunpack.c.l.b16 %v208
    %v669 = vunpack.c.h.b16 %v208
    %v670 = vunpack.c.l.b16 %v209
    %v671 = vunpack.c.h.b16 %v209
    %v672 = vunpack.c.l.b16 %v210
    %v673 = vunpack.c.h.b16 %v210
    %v674 = vunpack.c.l.b16 %v211
    %v675 = vunpack.c.h.b16 %v211
    %v676 = vunpack.c.l.b16 %v212
    %v677 = vunpack.c.h.b16 %v212
    %v678 = vunpack.c.l.b16 %v213
    %v679 = vunpack.c.h.b16 %v213
    %v680 = vunpack.c.l.b16 %v214
    %v681 = vunpack.c.h.b16 %v214
    %v682 = vunpack.c.l.b16 %v215
    %v683 = vunpack.c.h.b16 %v215
    %v684 = vunpack.c.l.b16 %v216
    %v685 = vunpack.c.h.b16 %v216
    %v686 = vunpack.c.l.b16 %v217
    %v687 = vunpack.c.h.b16 %v217
    %v688 = vunpack.c.l.b16 %v218
    %v689 = vunpack.c.h.b16 %v218
    %v690 = vunpack.c.l.b16 %v219
    %v691 = vunpack.c.h.b16 %v219
    %v692 = vunpack.c.l.b16 %v220
    %v693 = vunpack.c.h.b16 %v220
    %v694 = vunpack.c.l.b16 %v221
    %v695 = vunpack.c.h.b16 %v221
    %v696 = vunpack.c.l.b16 %v222
    %v697 = vunpack.c.h.b16 %v222
    %v698 = vunpack.c.l.b16 %v223
    %v699 = vunpack.c.h.b16 %v223
    %v700 = vunpack.c.l.b16 %v224
    %v701 = vunpack.c.h.b16 %v224
    %v702 = vunpack.c.l.b16 %v225
    %v703 = vunpack.c.h.b16 %v225
    %v704 = vunpack.c.l.b16 %v226
    %v705 = vunpack.c.h.b16 %v226
    %v706 = vunpack.c.l.b16 %v227
    %v707 = vunpack.c.h.b16 %v227
    %v708 = vunpack.c.l.b16 %v228
    %v709 = vunpack.c.h.b16 %v228
    %v710 = vunpack.c.l.b16 %v229
    %v711 = vunpack.c.h.b16 %v229
    %v712 = vunpack.c.l.b16 %v230
    %v713 = vunpack.c.h.b16 %v230
    %v714 = vunpack.c.l.b16 %v231
    %v715 = vunpack.c.h.b16 %v231
    %v716 = vunpack.c.l.b16 %v232
    %v717 = vunpack.c.h.b16 %v232
    %v718 = vunpack.c.l.b16 %v233
    %v719 = vunpack.c.h.b16 %v233
    %v720 = vunpack.c.l.b16 %v234
    %v721 = vunpack.c.h.b16 %v234
    %v722 = vunpack.c.l.b16 %v235
    %v723 = vunpack.c.h.b16 %v235
    %v724 = vunpack.c.l.b16 %v236
    %v725 = vunpack.c.h.b16 %v236
    %v726 = vunpack.c.l.b16 %v237
    %v727 = vunpack.c.h.b16 %v237
    %v728 = vunpack.c.l.b16 %v238
    %v729 = vunpack.c.h.b16 %v238
    %v730 = vunpack.c.l.b16 %v239
    %v731 = vunpack.c.h.b16 %v239
    %v732 = vunpack.c.l.b16 %v240
    %v733 = vunpack.c.h.b16 %v240
    %v734 = vunpack.c.l.b16 %v241
    %v735 = vunpack.c.h.b16 %v241
    %v736 = vunpack.c.l.b16 %v242
    %v737 = vunpack.c.h.b16 %v242
    %v738 = vunpack.c.l.b16 %v243
    %v739 = vunpack.c.h.b16 %v243
    %v740 = vunpack.c.l.b16 %v244
    %v741 = vunpack.c.h.b16 %v244
    %v742 = vunpack.c.l.b16 %v245
    %v743 = vunpack.c.h.b16 %v245
    %v744 = vunpack.c.l.b16 %v246
    %v745 = vunpack.c.h.b16 %v246
    %v746 = vunpack.c.l.b16 %v247
    %v747 = vunpack.c.h.b16 %v247
    %v748 = vunpack.c.l.b16 %v248
    %v749 = vunpack.c.h.b16 %v248
    %v750 = vunpack.c.l.b16 %v249
    %v751 = vunpack.c.h.b16 %v249
    %v752 = vunpack.c.l.b16 %v250
    %v753 = vunpack.c.h.b16 %v250
    %v754 = vunpack.c.l.b16 %v251
    %v755 = vunpack.c.h.b16 %v251
    %v756 = vunpack.c.l.b16 %v252
    %v757 = vunpack.c.h.b16 %v252
    %v758 = vunpack.c.l.b16 %v253
    %v759 = vunpack.c.h.b16 %v253
    %v760 = vunpack.c.l.b16 %v254
    %v761 = vunpack.c.h.b16 %v254
    %v762 = vunpack.c.l.b16 %v255
    %v763 = vunpack.c.h.b16 %v255
    %v764 = vunpack.c.l.b16 %v256
    %v765 = vunpack.c.h.b16 %v256
    %v766 = vunpack.c.l.b16 %v257
    %v767 = vunpack.c.h.b16 %v257
    %v768 = vunpack.c.l.b16 %v258
    %v769 = vunpack.c.h.b16 %v258
    %v770 = vunpack.c.l.b16 %v259
    %v771 = vunpack.c.h.b16 %v259
    %v772 = vunpack.c.l.b16 %v260
    %v773 = vunpack.c.h.b16 %v260
    %v774 = vunpack.c.l.b16 %v261
    %v775 = vunpack.c.h.b16 %v261
    %v776 = vunpack.c.l.b16 %v262
    %v777 = vunpack.c.h.b16 %v262
    %v778 = vunpack.c.l.b16 %v263
    %v779 = vunpack.c.h.b16 %v263
    %v780 = vunpack.c.l.b16 %v264
    %v781 = vunpack.c.h.b16 %v264
    %v782 = vunpack.c.l.b16 %v265
    %v783 = vunpack.c.h.b16 %v265
    %v784 = vunpack.c.l.b16 %v266
    %v785 = vunpack.c.h.b16 %v266
    %v786 = vunpack.c.l.b16 %v267
    %v787 = vunpack.c.h.b16 %v267
    %v788 = vunpack.c.l.b16 %v268
    %v789 = vunpack.c.h.b16 %v268
    %v790 = vunpack.c.l.b16 %v269
    %v791 = vunpack.c.h.b16 %v269
    %v792 = vunpack.c.l.b16 %v270
    %v793 = vunpack.c.h.b16 %v270
    %v794 = vunpack.c.l.b16 %v271
    %v795 = vunpack.c.h.b16 %v271
    %v796 = vunpack.c.l.b16 %v272
    %v797 = vunpack.c.h.b16 %v272
    %v798 = vunpack.c.l.b16 %v273
    %v799 = vunpack.c.h.b16 %v273
    %v800 = vunpack.c.l.b16 %v274
    %v801 = vunpack.c.h.b16 %v274
    %v802 = vunpack.c.l.b16 %v275
    %v803 = vunpack.c.h.b16 %v275
    %v804 = vunpack.c.l.b16 %v276
    %v805 = vunpack.c.h.b16 %v276
    %v806 = vunpack.c.l.b16 %v277
    %v807 = vunpack.c.h.b16 %v277
    %v808 = vunpack.c.l.b16 %v278
    %v809 = vunpack.c.h.b16 %v278
    %v810 = vunpack.c.l.b16 %v279
    %v811 = vunpack.c.h.b16 %v279
    %v812 = vunpack.c.l.b16 %v280
    %v813 = vunpack.c.h.b16 %v280
    %v814 = vunpack.c.l.b16 %v281
    %v815 = vunpack.c.h.b16 %v281
    %v816 = vunpack.c.l.b16 %v282
    %v817 = vunpack.c.h.b16 %v282
    %v818 = vunpack.c.l.b16 %v283
    %v819 = vunpack.c.h.b16 %v283
    %v820 = vunpack.c.l.b16 %v284
    %v821 = vunpack.c.h.b16 %v284
    %v822 = vunpack.c.l.b16 %v285
    %v823 = vunpack.c.h.b16 %v285
    %v824 = vunpack.c.l.b16 %v286
    %v825 = vunpack.c.h.b16 %v286
    %v826 = vunpack.c.l.b16 %v287
    %v827 = vunpack.c.h.b16 %v287
    %v828 = vunpack.c.l.b16 %v288
    %v829 = vunpack.c.h.b16 %v288
    %v830 = vunpack.c.l.b16 %v289
    %v831 = vunpack.c.h.b16 %v289
    %v832 = vunpack.c.l.b16 %v290
    %v833 = vunpack.c.h.b16 %v290
    %v834 = vunpack.c.l.b16 %v291
    %v835 = vunpack.c.h.b16 %v291
    %v836 = vunpack.c.l.b16 %v292
    %v837 = vunpack.c.h.b16 %v292
    %v838 = vunpack.c.l.b16 %v293
    %v839 = vunpack.c.h.b16 %v293
    %v840 = vunpack.c.l.b16 %v294
    %v841 = vunpack.c.h.b16 %v294
    %v842 = vunpack.c.l.b16 %v295
    %v843 = vunpack.c.h.b16 %v295
    %v844 = vunpack.c.l.b16 %v296
    %v845 = vunpack.c.h.b16 %v296
    %v846 = vunpack.c.l.b16 %v297
    %v847 = vunpack.c.h.b16 %v297
    %v848 = vunpack.c.l.b16 %v298
    %v849 = vunpack.c.h.b16 %v298
    %v850 = vunpack.c.l.b16 %v299
    %v851 = vunpack.c.h.b16 %v299
    %v852 = vunpack.c.l.b16 %v300
    %v853 = vunpack.c.h.b16 %v300
    %v854 = vunpack.c.l.b16 %v301
    %v855 = vunpack.c.h.b16 %v301
    %v856 = vunpack.c.l.b16 %v302
    %v857 = vunpack.c.h.b16 %v302
    %v858 = vunpack.c.l.b16 %v303
    %v859 = vunpack.c.h.b16 %v303
    %v860 = vunpack.c.l.b16 %v304
    %v861 = vunpack.c.h.b16 %v304
    %v862 = vunpack.c.l.b16 %v305
    %v863 = vunpack.c.h.b16 %v305
    %v864 = vunpack.c.l.b16 %v306
    %v865 = vunpack.c.h.b16 %v306
    %v866 = vunpack.c.l.b16 %v307
    %v867 = vunpack.c.h.b16 %v307
    %v868 = vunpack.c.l.b16 %v308
    %v869 = vunpack.c.h.b16 %v308
    %v870 = vunpack.c.l.b16 %v309
    %v871 = vunpack.c.h.b16 %v309
    %v872 = vunpack.c.l.b16 %v310
    %v873 = vunpack.c.h.b16 %v310
    %v874 = vunpack.c.l.b16 %v311
    %v875 = vunpack.c.h.b16 %v311
    %v876 = vunpack.c.l.b16 %v312
    %v877 = vunpack.c.h.b16 %v312
    %v878 = vunpack.c.l.b16 %v313
    %v879 = vunpack.c.h.b16 %v313
    %v880 = vunpack.c.l.b16 %v314
    %v881 = vunpack.c.h.b16 %v314
    %v882 = vunpack.c.l.b16 %v315
    %v883 = vunpack.c.h.b16 %v315
    %v884 = vunpack.c.l.b16 %v316
    %v885 = vunpack.c.h.b16 %v316
    %v886 = vunpack.c.l.b16 %v317
    %v887 = vunpack.c.h.b16 %v317
    %v888 = vunpack.c.l.b16 %v318
    %v889 = vunpack.c.h.b16 %v318
    %v890 = vunpack.c.l.b16 %v319
    %v891 = vunpack.c.h.b16 %v319
    %v892 = vunpack.c.l.b16 %v320
    %v893 = vunpack.c.h.b16 %v320
    %v894 = vunpack.c.l.b16 %v321
    %v895 = vunpack.c.h.b16 %v321
    %v896 = vunpack.c.l.b16 %v322
    %v897 = vunpack.c.h.b16 %v322
    %v898 = vunpack.c.l.b16 %v323
    %v899 = vunpack.c.h.b16 %v323
    %v900 = vunpack.c.l.b16 %v324
    %v901 = vunpack.c.h.b16 %v324
    %v902 = vunpack.c.l.b16 %v325
    %v903 = vunpack.c.h.b16 %v325
    %v904 = vunpack.c.l.b16 %v326
    %v905 = vunpack.c.h.b16 %v326
    %v906 = vunpack.c.l.b16 %v327
    %v907 = vunpack.c.h.b16 %v327
    %v908 = vunpack.c.l.b16 %v328
    %v909 = vunpack.c.h.b16 %v328
    %v910 = vunpack.c.l.b16 %v329
    %v911 = vunpack.c.h.b16 %v329
    %v912 = vunpack.c.l.b16 %v330
    %v913 = vunpack.c.h.b16 %v330
    %v914 = vunpack.c.l.b16 %v331
    %v915 = vunpack.c.h.b16 %v331
    %v916 = vunpack.c.l.b16 %v332
    %v917 = vunpack.c.h.b16 %v332
    %v918 = vunpack.c.l.b16 %v333
    %v919 = vunpack.c.h.b16 %v333
    %v920 = vunpack.c.l.b16 %v334
    %v921 = vunpack.c.h.b16 %v334
    %v922 = vunpack.c.l.b16 %v335
    %v923 = vunpack.c.h.b16 %v335
    %v924 = vunpack.c.l.b16 %v336
    %v925 = vunpack.c.h.b16 %v336
    %v926 = vunpack.c.l.b16 %v337
    %v927 = vunpack.c.h.b16 %v337
    %v928 = vunpack.c.l.b16 %v338
    %v929 = vunpack.c.h.b16 %v338
    %v930 = vunpack.c.l.b16 %v339
    %v931 = vunpack.c.h.b16 %v339
    %v932 = vunpack.c.l.b16 %v340
    %v933 = vunpack.c.h.b16 %v340
    %v934 = vunpack.c.l.b16 %v341
    %v935 = vunpack.c.h.b16 %v341
    %v936 = vunpack.c.l.b16 %v342
    %v937 = vunpack.c.h.b16 %v342
    %v938 = vunpack.c.l.b16 %v343
    %v939 = vunpack.c.h.b16 %v343
    %v940 = vunpack.c.l.b16 %v344
    %v941 = vunpack.c.h.b16 %v344
    %v942 = vunpack.c.l.b16 %v345
    %v943 = vunpack.c.h.b16 %v345
    %v944 = vunpack.c.l.b16 %v346
    %v945 = vunpack.c.h.b16 %v346
    %v946 = vunpack.c.l.b16 %v347
    %v947 = vunpack.c.h.b16 %v347
    %v948 = vunpack.c.l.b16 %v348
    %v949 = vunpack.c.h.b16 %v348
    %v950 = vunpack.c.l.b16 %v349
    %v951 = vunpack.c.h.b16 %v349
    %v952 = vunpack.c.l.b16 %v350
    %v953 = vunpack.c.h.b16 %v350
    %v954 = vunpack.c.l.b16 %v351
    %v955 = vunpack.c.h.b16 %v351
    %v956 = vunpack.c.l.b16 %v352
    %v957 = vunpack.c.h.b16 %v352
    %v958 = vunpack.c.l.b16 %v353
    %v959 = vunpack.c.h.b16 %v353
    %v960 = vunpack.c.l.b16 %v354
    %v961 = vunpack.c.h.b16 %v354
    %v962 = vunpack.c.l.b16 %v355
    %v963 = vunpack.c.h.b16 %v355
    %v964 = vunpack.c.l.b16 %v356
    %v965 = vunpack.c.h.b16 %v356
    %v966 = vunpack.c.l.b16 %v357
    %v967 = vunpack.c.h.b16 %v357
    %v968 = vpack.c.b16 %v580, %v576
    %v969 = vpack.c.b16 %v581, %v577
    %v970 = vpack.c.b16 %v582, %v578
    %v971 = vpack.c.b16 %v583, %v579
    %v972 = vpack.c.b16 %v588, %v584
    %v973 = vpack.c.b16 %v589, %v585
    %v974 = vpack.c.b16 %v590, %v586
    %v975 = vpack.c.b16 %v591, %v587
    %v976 = vpack.c.b16 %v596, %v592
    %v977 = vpack.c.b16 %v597, %v593
    %v978 = vpack.c.b16 %v598, %v594
    %v979 = vpack.c.b16 %v599, %v595
    %v980 = vpack.c.b16 %v604, %v600
    %v981 = vpack.c.b16 %v605, %v601
    %v982 = vpack.c.b16 %v606, %v602
    %v983 = vpack.c.b16 %v607, %v603
    %v984 = vpack.c.b16 %v612, %v608
    %v985 = vpack.c.b16 %v613, %v609
    %v986 = vpack.c.b16 %v614, %v610
    %v987 = vpack.c.b16 %v615, %v611
    %v988 = vpack.c.b16 %v620, %v616
    %v989 = vpack.c.b16 %v621, %v617
    %v990 = vpack.c.b16 %v622, %v618
    %v991 = vpack.c.b16 %v623, %v619
    %v992 = vpack.c.b16 %v628, %v624
    %v993 = vpack.c.b16 %v629, %v625
    %v994 = vpack.c.b16 %v630, %v626
    %v995 = vpack.c.b16 %v631, %v627
    %v996 = vpack.c.b16 %v636, %v632
    %v997 = vpack.c.b16 %v637, %v633
    %v998 = vpack.c.b16 %v638, %v634
    %v999 = vpack.c.b16 %v639, %v635
    %v1000 = vpack.c.b16 %v644, %v640
    %v1001 = vpack.c.b16 %v645, %v641
    %v1002 = vpack.c.b16 %v646, %v642
    %v1003 = vpack.c.b16 %v647, %v643
    %v1004 = vpack.c.b16 %v652, %v648
    %v1005 = vpack.c.b16 %v653, %v649
    %v1006 = vpack.c.b16 %v654, %v650
    %v1007 = vpack.c.b16 %v655, %v651
    %v1008 = vpack.c.b16 %v660, %v656
    %v1009 = vpack.c.b16 %v661, %v657
    %v1010 = vpack.c.b16 %v662, %v658
    %v1011 = vpack.c.b16 %v663, %v659
    %v1012 = vpack.c.b16 %v668, %v664
    %v1013 = vpack.c.b16 %v669, %v665
    %v1014 = vpack.c.b16 %v670, %v666
    %v1015 = vpack.c.b16 %v671, %v667
    %v1016 = vpack.c.b16 %v676, %v672
    %v1017 = vpack.c.b16 %v677, %v673
    %v1018 = vpack.c.b16 %v678, %v674
    %v1019 = vpack.c.b16 %v679, %v675
    %v1020 = vpack.c.b16 %v684, %v680
    %v1021 = vpack.c.b16 %v685, %v681
    %v1022 = vpack.c.b16 %v686, %v682
    %v1023 = vpack.c.b16 %v687, %v683
    %v1024 = vpack.c.b16 %v692, %v688
    %v1025 = vpack.c.b16 %v693, %v689
    %v1026 = vpack.c.b16 %v694, %v690
    %v1027 = vpack.c.b16 %v695, %v691
    %v1028 = vpack.c.b16 %v700, %v696
    %v1029 = vpack.c.b16 %v701, %v697
    %v1030 = vpack.c.b16 %v702, %v698
    %v1031 = vpack.c.b16 %v703, %v699
    %v1032 = vpack.c.b16 %v708, %v704
    %v1033 = vpack.c.b16 %v709, %v705
    %v1034 = vpack.c.b16 %v710, %v706
    %v1035 = vpack.c.b16 %v711, %v707
    %v1036 = vpack.c.b16 %v716, %v712
    %v1037 = vpack.c.b16 %v717, %v713
    %v1038 = vpack.c.b16 %v718, %v714
    %v1039 = vpack.c.b16 %v719, %v715
    %v1040 = vpack.c.b16 %v724, %v720
    %v1041 = vpack.c.b16 %v725, %v721
    %v1042 = vpack.c.b16 %v726, %v722
    %v1043 = vpack.c.b16 %v727, %v723
    %v1044 = vpack.c.b16 %v732, %v728
    %v1045 = vpack.c.b16 %v733, %v729
    %v1046 = vpack.c.b16 %v734, %v730
    %v1047 = vpack.c.b16 %v735, %v731
    %v1048 = vpack.c.b16 %v740, %v736
    %v1049 = vpack.c.b16 %v741, %v737
    %v1050 = vpack.c.b16 %v742, %v738
    %v1051 = vpack.c.b16 %v743, %v739
    %v1052 = vpack.c.b16 %v748, %v744
    %v1053 = vpack.c.b16 %v749, %v745
    %v1054 = vpack.c.b16 %v750, %v746
    %v1055 = vpack.c.b16 %v751, %v747
    %v1056 = vpack.c.b16 %v756, %v752
    %v1057 = vpack.c.b16 %v757, %v753
    %v1058 = vpack.c.b16 %v758, %v754
    %v1059 = vpack.c.b16 %v759, %v755
    %v1060 = vpack.c.b16 %v764, %v760
    %v1061 = vpack.c.b16 %v765, %v761
    %v1062 = vpack.c.b16 %v766, %v762
    %v1063 = vpack.c.b16 %v767, %v763
    %v1064 = vpack.c.b16 %v772, %v768
    %v1065 = vpack.c.b16 %v773, %v769
    %v1066 = vpack.c.b16 %v774, %v770
    %v1067 = vpack.c.b16 %v775, %v771
    %v1068 = vpack.c.b16 %v780, %v776
    %v1069 = vpack.c.b16 %v781, %v777
    %v1070 = vpack.c.b16 %v782, %v778
    %v1071 = vpack.c.b16 %v783, %v779
    %v1072 = vpack.c.b16 %v788, %v784
    %v1073 = vpack.c.b16 %v789, %v785
    %v1074 = vpack.c.b16 %v790, %v786
    %v1075 = vpack.c.b16 %v791, %v787
    %v1076 = vpack.c.b16 %v796, %v792
    %v1077 = vpack.c.b16 %v797, %v793
    %v1078 = vpack.c.b16 %v798, %v794
    %v1079 = vpack.c.b16 %v799, %v795
    %v1080 = vpack.c.b16 %v804, %v800
    %v1081 = vpack.c.b16 %v805, %v801
    %v1082 = vpack.c.b16 %v806, %v802
    %v1083 = vpack.c.b16 %v807, %v803
    %v1084 = vpack.c.b16 %v812, %v808
    %v1085 = vpack.c.b16 %v813, %v809
    %v1086 = vpack.c.b16 %v814, %v810
    %v1087 = vpack.c.b16 %v815, %v811
    %v1088 = vpack.c.b16 %v820, %v816
    %v1089 = vpack.c.b16 %v821, %v817
    %v1090 = vpack.c.b16 %v822, %v818
    %v1091 = vpack.c.b16 %v823, %v819
    %v1092 = vpack.c.b16 %v828, %v824
    %v1093 = vpack.c.b16 %v829, %v825
    %v1094 = vpack.c.b16 %v830, %v826
    %v1095 = vpack.c.b16 %v831, %v827
    %v1096 = vpack.c.b16 %v836, %v832
    %v1097 = vpack.c.b16 %v837, %v833
    %v1098 = vpack.c.b16 %v838, %v834
    %v1099 = vpack.c.b16 %v839, %v835
    %v1100 = vpack.c.b16 %v844, %v840
    %v1101 = vpack.c.b16 %v845, %v841
    %v1102 = vpack.c.b16 %v846, %v842
    %v1103 = vpack.c.b16 %v847, %v843
    %v1104 = vpack.c.b16 %v852, %v848
    %v1105 = vpack.c.b16 %v853, %v849
    %v1106 = vpack.c.b16 %v854, %v850
    %v1107 = vpack.c.b16 %v855, %v851
    %v1108 = vpack.c.b16 %v860, %v856
    %v1109 = vpack.c.b16 %v861, %v857
    %v1110 = vpack.c.b16 %v862, %v858
    %v1111 = vpack.c.b16 %v863, %v859
    %v1112 = vpack.c.b16 %v868, %v864
    %v1113 = vpack.c.b16 %v869, %v865
    %v1114 = vpack.c.b16 %v870, %v866
    %v1115 = vpack.c.b16 %v871, %v867
    %v1116 = vpack.c.b16 %v876, %v872
    %v1117 = vpack.c.b16 %v877, %v873
    %v1118 = vpack.c.b16 %v878, %v874
    %v1119 = vpack.c.b16 %v879, %v875
    %v1120 = vpack.c.b16 %v884, %v880
    %v1121 = vpack.c.b16 %v885, %v881
    %v1122 = vpack.c.b16 %v886, %v882
    %v1123 = vpack.c.b16 %v887, %v883
    %v1124 = vpack.c.b16 %v892, %v888
    %v1125 = vpack.c.b16 %v893, %v889
    %v1126 = vpack.c.b16 %v894, %v890
    %v1127 = vpack.c.b16 %v895, %v891
    %v1128 = vpack.c.b16 %v900, %v896
    %v1129 = vpack.c.b16 %v901, %v897
    %v1130 = vpack.c.b16 %v902, %v898
    %v1131 = vpack.c.b16 %v903, %v899
    %v1132 = vpack.c.b16 %v908, %v904
    %v1133 = vpack.c.b16 %v909, %v905
    %v1134 = vpack.c.b16 %v910, %v906
    %v1135 = vpack.c.b16 %v911, %v907
    %v1136 = vpack.c.b16 %v916, %v912
    %v1137 = vpack.c.b16 %v917, %v913
    %v1138 = vpack.c.b16 %v918, %v914
    %v1139 = vpack.c.b16 %v919, %v915
    %v1140 = vpack.c.b16 %v924, %v920
    %v1141 = vpack.c.b16 %v925, %v921
    %v1142 = vpack.c.b16 %v926, %v922
    %v1143 = vpack.c.b16 %v927, %v923
    %v1144 = vpack.c.b16 %v932, %v928
    %v1145 = vpack.c.b16 %v933, %v929
    %v1146 = vpack.c.b16 %v934, %v930
    %v1147 = vpack.c.b16 %v935, %v931
    %v1148 = vpack.c.b16 %v940, %v936
    %v1149 = vpack.c.b16 %v941, %v937
    %v1150 = vpack.c.b16 %v942, %v938
    %v1151 = vpack.c.b16 %v943, %v939
    %v1152 = vpack.c.b16 %v948, %v944
    %v1153 = vpack.c.b16 %v949, %v945
    %v1154 = vpack.c.b16 %v950, %v946
    %v1155 = vpack.c.b16 %v951, %v947
    %v1156 = vpack.c.b16 %v956, %v952
    %v1157 = vpack.c.b16 %v957, %v953
    %v1158 = vpack.c.b16 %v958, %v954
    %v1159 = vpack.c.b16 %v959, %v955
    %v1160 = vpack.c.b16 %v964, %v960
    %v1161 = vpack.c.b16 %v965, %v961
    %v1162 = vpack.c.b16 %v966, %v962
    %v1163 = vpack.c.b16 %v967, %v963
    %vm1360 = vcmask 130048
    %v1362 = vsel %vm1360, %v161, 0
    %1364 = vmatprep.subr.bf16.mxu0 %v969
    %1365 = vmatpush1.bf16.msra.mxu0 %v968
    %1366 = vmatprep.subr.bf16.mxu0 %v973
    %1367 = vmatpush1.bf16.msra.mxu0 %v972
    %1368 = vmatprep.subr.bf16.mxu0 %v977
    %1369 = vmatpush1.bf16.msra.mxu0 %v976
    %1370 = vmatprep.subr.bf16.mxu0 %v981
    %1371 = vmatpush1.bf16.msra.mxu0 %v980
    %1372 = vmatprep.subr.bf16.mxu0 %v985
    %1373 = vmatpush1.bf16.msra.mxu0 %v984
    %1374 = vmatprep.subr.bf16.mxu0 %v989
    %1375 = vmatpush1.bf16.msra.mxu0 %v988
    %1376 = vmatprep.subr.bf16.mxu0 %v993
    %1377 = vmatpush1.bf16.msra.mxu0 %v992
    %1378 = vmatprep.subr.bf16.mxu0 %v997
    %1379 = vmatpush1.bf16.msra.mxu0 %v996
    %1380 = vmatprep.subr.bf16.mxu0 %v1001
    %1381 = vmatpush1.bf16.msra.mxu0 %v1000
    %1382 = vmatprep.subr.bf16.mxu0 %v1005
    %1383 = vmatpush1.bf16.msra.mxu0 %v1004
    %1384 = vmatprep.subr.bf16.mxu0 %v1009
    %1385 = vmatpush1.bf16.msra.mxu0 %v1008
    %1386 = vmatprep.subr.bf16.mxu0 %v1013
    %1387 = vmatpush1.bf16.msra.mxu0 %v1012
    %1388 = vmatprep.subr.bf16.mxu0 %v1017
    %1389 = vmatpush1.bf16.msra.mxu0 %v1016
    %1390 = vmatprep.subr.bf16.mxu0 %v1021
    %1391 = vmatpush1.bf16.msra.mxu0 %v1020
    %1392 = vmatprep.subr.bf16.mxu0 %v1025
    %1393 = vmatpush1.bf16.msra.mxu0 %v1024
    %1394 = vmatprep.subr.bf16.mxu0 %v1029
    %1395 = vmatpush1.bf16.msra.mxu0 %v1028
    %1396 = vmatprep.mubr.bf16.mxu0 %v156
    %1397 = vmatmul.mubr.bf16.gmra.mrb[0].mxu0 %v155
    %v1398 = vpop.f32.mrb[0].mxu0
    %v1399 = vadd.f32 %v363, %v1398
    %v1400 = vpop.f32.mrb[0].mxu0
    %v1401 = vadd.f32 %v367, %v1400
    %v1402 = vpop.f32.mrb[0].mxu0
    %v1403 = vadd.f32 %v363, %v1402
    %v1404 = vpop.f32.mrb[0].mxu0
    %v1405 = vadd.f32 %v367, %v1404
    %1406 = vdwg.mxu0
    %1407 = vmatprep.subr.bf16.mxu0 %v1033
    %1408 = vmatpush1.bf16.msra.mxu0 %v1032
    %1409 = vmatprep.subr.bf16.mxu0 %v1037
    %1410 = vmatpush1.bf16.msra.mxu0 %v1036
    %1411 = vmatprep.subr.bf16.mxu0 %v1041
    %1412 = vmatpush1.bf16.msra.mxu0 %v1040
    %1413 = vmatprep.subr.bf16.mxu0 %v1045
    %1414 = vmatpush1.bf16.msra.mxu0 %v1044
    %1415 = vmatprep.subr.bf16.mxu0 %v1049
    %1416 = vmatpush1.bf16.msra.mxu0 %v1048
    %1417 = vmatprep.subr.bf16.mxu0 %v1053
    %1418 = vmatpush1.bf16.msra.mxu0 %v1052
    %1419 = vmatprep.subr.bf16.mxu0 %v1057
    %1420 = vmatpush1.bf16.msra.mxu0 %v1056
    %1421 = vmatprep.subr.bf16.mxu0 %v1061
    %1422 = vmatpush1.bf16.msra.mxu0 %v1060
    %1423 = vmatprep.subr.bf16.mxu0 %v1065
    %1424 = vmatpush1.bf16.msra.mxu0 %v1064
    %1425 = vmatprep.subr.bf16.mxu0 %v1069
    %1426 = vmatpush1.bf16.msra.mxu0 %v1068
    %1427 = vmatprep.subr.bf16.mxu0 %v1073
    %1428 = vmatpush1.bf16.msra.mxu0 %v1072
    %1429 = vmatprep.subr.bf16.mxu0 %v1077
    %1430 = vmatpush1.bf16.msra.mxu0 %v1076
    %1431 = vmatprep.subr.bf16.mxu0 %v1081
    %1432 = vmatpush1.bf16.msra.mxu0 %v1080
    %1433 = vmatprep.subr.bf16.mxu0 %v1085
    %1434 = vmatpush1.bf16.msra.mxu0 %v1084
    %1435 = vmatprep.subr.bf16.mxu0 %v1089
    %1436 = vmatpush1.bf16.msra.mxu0 %v1088
    %1437 = vmatprep.subr.bf16.mxu0 %v1093
    %1438 = vmatpush1.bf16.msra.mxu0 %v1092
    %1439 = vmatprep.mubr.bf16.mxu0 %v158
    %1440 = vmatmul.mubr.bf16.gmra.mrb[0].mxu0 %v157
    %v1441 = vpop.f32.mrb[0].mxu0
    %v1442 = vadd.f32 %v1399, %v1441
    %v1443 = vpop.f32.mrb[0].mxu0
    %v1444 = vadd.f32 %v1401, %v1443
    %v1445 = vpop.f32.mrb[0].mxu0
    %v1446 = vadd.f32 %v1403, %v1445
    %v1447 = vpop.f32.mrb[0].mxu0
    %v1448 = vadd.f32 %v1405, %v1447
    %1449 = vdwg.mxu0
    %1450 = vmatprep.subr.bf16.mxu0 %v1097
    %1451 = vmatpush1.bf16.msra.mxu0 %v1096
    %1452 = vmatprep.subr.bf16.mxu0 %v1101
    %1453 = vmatpush1.bf16.msra.mxu0 %v1100
    %1454 = vmatprep.subr.bf16.mxu0 %v1105
    %1455 = vmatpush1.bf16.msra.mxu0 %v1104
    %1456 = vmatprep.subr.bf16.mxu0 %v1109
    %1457 = vmatpush1.bf16.msra.mxu0 %v1108
    %1458 = vmatprep.subr.bf16.mxu0 %v1113
    %1459 = vmatpush1.bf16.msra.mxu0 %v1112
    %1460 = vmatprep.subr.bf16.mxu0 %v1117
    %1461 = vmatpush1.bf16.msra.mxu0 %v1116
    %1462 = vmatprep.subr.bf16.mxu0 %v1121
    %1463 = vmatpush1.bf16.msra.mxu0 %v1120
    %1464 = vmatprep.subr.bf16.mxu0 %v1125
    %1465 = vmatpush1.bf16.msra.mxu0 %v1124
    %1466 = vmatprep.subr.bf16.mxu0 %v1129
    %1467 = vmatpush1.bf16.msra.mxu0 %v1128
    %1468 = vmatprep.subr.bf16.mxu0 %v1133
    %1469 = vmatpush1.bf16.msra.mxu0 %v1132
    %1470 = vmatprep.subr.bf16.mxu0 %v1137
    %1471 = vmatpush1.bf16.msra.mxu0 %v1136
    %1472 = vmatprep.subr.bf16.mxu0 %v1141
    %1473 = vmatpush1.bf16.msra.mxu0 %v1140
    %1474 = vmatprep.subr.bf16.mxu0 %v1145
    %1475 = vmatpush1.bf16.msra.mxu0 %v1144
    %1476 = vmatprep.subr.bf16.mxu0 %v1149
    %1477 = vmatpush1.bf16.msra.mxu0 %v1148
    %1478 = vmatprep.subr.bf16.mxu0 %v1153
    %1479 = vmatpush1.bf16.msra.mxu0 %v1152
    %1480 = vmatprep.subr.bf16.mxu0 %v1157
    %1481 = vmatpush1.bf16.msra.mxu0 %v1156
    %1482 = vmatprep.mubr.bf16.mxu0 %v160
    %1483 = vmatmul.mubr.bf16.gmra.mrb[0].mxu0 %v159
    %v1484 = vpop.f32.mrb[0].mxu0
    %v1485 = vadd.f32 %v1442, %v1484
    %v1486 = vpop.f32.mrb[0].mxu0
    %v1487 = vadd.f32 %v1444, %v1486
    %v1488 = vpop.f32.mrb[0].mxu0
    %v1489 = vadd.f32 %v1446, %v1488
    %v1490 = vpop.f32.mrb[0].mxu0
    %v1491 = vadd.f32 %v1448, %v1490
    %1492 = vdwg.mxu0
    %1493 = vmatprep.subr.bf16.mxu0 %v1161
    %1494 = vmatpush1.bf16.msra.mxu0 %v1160
    %1495 = vmatprep.subr.bf16.mxu0 0
    %1496 = vmatpush1.bf16.msra.mxu0 0
    %1497 = vmatprep.subr.bf16.mxu0 0
    %1498 = vmatpush1.bf16.msra.mxu0 0
    %1499 = vmatprep.subr.bf16.mxu0 0
    %1500 = vmatpush1.bf16.msra.mxu0 0
    %1501 = vmatprep.subr.bf16.mxu0 0
    %1502 = vmatpush1.bf16.msra.mxu0 0
    %1503 = vmatprep.subr.bf16.mxu0 0
    %1504 = vmatpush1.bf16.msra.mxu0 0
    %1505 = vmatprep.subr.bf16.mxu0 0
    %1506 = vmatpush1.bf16.msra.mxu0 0
    %1507 = vmatprep.subr.bf16.mxu0 0
    %1508 = vmatpush1.bf16.msra.mxu0 0
    %1509 = vmatprep.subr.bf16.mxu0 0
    %1510 = vmatpush1.bf16.msra.mxu0 0
    %1511 = vmatprep.subr.bf16.mxu0 0
    %1512 = vmatpush1.bf16.msra.mxu0 0
    %1513 = vmatprep.subr.bf16.mxu0 0
    %1514 = vmatpush1.bf16.msra.mxu0 0
    %1515 = vmatprep.subr.bf16.mxu0 0
    %1516 = vmatpush1.bf16.msra.mxu0 0
    %1517 = vmatprep.subr.bf16.mxu0 0
    %1518 = vmatpush1.bf16.msra.mxu0 0
    %1519 = vmatprep.subr.bf16.mxu0 0
    %1520 = vmatpush1.bf16.msra.mxu0 0
    %1521 = vmatprep.subr.bf16.mxu0 0
    %1522 = vmatpush1.bf16.msra.mxu0 0
    %1523 = vmatprep.subr.bf16.mxu0 0
    %1524 = vmatpush1.bf16.msra.mxu0 0
    %1525 = vmatprep.mubr.bf16.mxu0 0
    %1526 = vmatmul.mubr.bf16.gmra.mrb[0].mxu0 %v1362
    %v1527 = vpop.f32.mrb[0].mxu0
    %v1528 = vadd.f32 %v1485, %v1527
    %v1529 = vpop.f32.mrb[0].mxu0
    %v1530 = vadd.f32 %v1487, %v1529
    %v1531 = vpop.f32.mrb[0].mxu0
    %v1532 = vadd.f32 %v1489, %v1531
    %v1533 = vpop.f32.mrb[0].mxu0
    %v1534 = vadd.f32 %v1491, %v1533
    %1535 = vdwg.mxu0
    %1536 = vmatprep.subr.bf16.mxu0 %v971
    %1537 = vmatpush1.bf16.msra.mxu0 %v970
    %1538 = vmatprep.subr.bf16.mxu0 %v975
    %1539 = vmatpush1.bf16.msra.mxu0 %v974
    %1540 = vmatprep.subr.bf16.mxu0 %v979
    %1541 = vmatpush1.bf16.msra.mxu0 %v978
    %1542 = vmatprep.subr.bf16.mxu0 %v983
    %1543 = vmatpush1.bf16.msra.mxu0 %v982
    %1544 = vmatprep.subr.bf16.mxu0 %v987
    %1545 = vmatpush1.bf16.msra.mxu0 %v986
    %1546 = vmatprep.subr.bf16.mxu0 %v991
    %1547 = vmatpush1.bf16.msra.mxu0 %v990
    %1548 = vmatprep.subr.bf16.mxu0 %v995
    %1549 = vmatpush1.bf16.msra.mxu0 %v994
    %1550 = vmatprep.subr.bf16.mxu0 %v999
    %1551 = vmatpush1.bf16.msra.mxu0 %v998
    %1552 = vmatprep.subr.bf16.mxu0 %v1003
    %1553 = vmatpush1.bf16.msra.mxu0 %v1002
    %1554 = vmatprep.subr.bf16.mxu0 %v1007
    %1555 = vmatpush1.bf16.msra.mxu0 %v1006
    %1556 = vmatprep.subr.bf16.mxu0 %v1011
    %1557 = vmatpush1.bf16.msra.mxu0 %v1010
    %1558 = vmatprep.subr.bf16.mxu0 %v1015
    %1559 = vmatpush1.bf16.msra.mxu0 %v1014
    %1560 = vmatprep.subr.bf16.mxu0 %v1019
    %1561 = vmatpush1.bf16.msra.mxu0 %v1018
    %1562 = vmatprep.subr.bf16.mxu0 %v1023
    %1563 = vmatpush1.bf16.msra.mxu0 %v1022
    %1564 = vmatprep.subr.bf16.mxu0 %v1027
    %1565 = vmatpush1.bf16.msra.mxu0 %v1026
    %1566 = vmatprep.subr.bf16.mxu0 %v1031
    %1567 = vmatpush1.bf16.msra.mxu0 %v1030
    %1568 = vmatprep.mubr.bf16.mxu0 %v156
    %1569 = vmatmul.mubr.bf16.gmra.mrb[0].mxu0 %v155
    %v1570 = vpop.f32.mrb[0].mxu0
    %v1571 = vadd.f32 %v371, %v1570
    %v1572 = vpop.f32.mrb[0].mxu0
    %v1573 = vadd.f32 %v375, %v1572
    %v1574 = vpop.f32.mrb[0].mxu0
    %v1575 = vadd.f32 %v371, %v1574
    %v1576 = vpop.f32.mrb[0].mxu0
    %v1577 = vadd.f32 %v375, %v1576
    %1578 = vdwg.mxu0
    %1579 = vmatprep.subr.bf16.mxu0 %v1035
    %1580 = vmatpush1.bf16.msra.mxu0 %v1034
    %1581 = vmatprep.subr.bf16.mxu0 %v1039
    %1582 = vmatpush1.bf16.msra.mxu0 %v1038
    %1583 = vmatprep.subr.bf16.mxu0 %v1043
    %1584 = vmatpush1.bf16.msra.mxu0 %v1042
    %1585 = vmatprep.subr.bf16.mxu0 %v1047
    %1586 = vmatpush1.bf16.msra.mxu0 %v1046
    %1587 = vmatprep.subr.bf16.mxu0 %v1051
    %1588 = vmatpush1.bf16.msra.mxu0 %v1050
    %1589 = vmatprep.subr.bf16.mxu0 %v1055
    %1590 = vmatpush1.bf16.msra.mxu0 %v1054
    %1591 = vmatprep.subr.bf16.mxu0 %v1059
    %1592 = vmatpush1.bf16.msra.mxu0 %v1058
    %1593 = vmatprep.subr.bf16.mxu0 %v1063
    %1594 = vmatpush1.bf16.msra.mxu0 %v1062
    %1595 = vmatprep.subr.bf16.mxu0 %v1067
    %1596 = vmatpush1.bf16.msra.mxu0 %v1066
    %1597 = vmatprep.subr.bf16.mxu0 %v1071
    %1598 = vmatpush1.bf16.msra.mxu0 %v1070
    %1599 = vmatprep.subr.bf16.mxu0 %v1075
    %1600 = vmatpush1.bf16.msra.mxu0 %v1074
    %1601 = vmatprep.subr.bf16.mxu0 %v1079
    %1602 = vmatpush1.bf16.msra.mxu0 %v1078
    %1603 = vmatprep.subr.bf16.mxu0 %v1083
    %1604 = vmatpush1.bf16.msra.mxu0 %v1082
    %1605 = vmatprep.subr.bf16.mxu0 %v1087
    %1606 = vmatpush1.bf16.msra.mxu0 %v1086
    %1607 = vmatprep.subr.bf16.mxu0 %v1091
    %1608 = vmatpush1.bf16.msra.mxu0 %v1090
    %1609 = vmatprep.subr.bf16.mxu0 %v1095
    %1610 = vmatpush1.bf16.msra.mxu0 %v1094
    %1611 = vmatprep.mubr.bf16.mxu0 %v158
    %1612 = vmatmul.mubr.bf16.gmra.mrb[0].mxu0 %v157
    %v1613 = vpop.f32.mrb[0].mxu0
    %v1614 = vadd.f32 %v1571, %v1613
    %v1615 = vpop.f32.mrb[0].mxu0
    %v1616 = vadd.f32 %v1573, %v1615
    %v1617 = vpop.f32.mrb[0].mxu0
    %v1618 = vadd.f32 %v1575, %v1617
    %v1619 = vpop.f32.mrb[0].mxu0
    %v1620 = vadd.f32 %v1577, %v1619
    %1621 = vdwg.mxu0
    %1622 = vmatprep.subr.bf16.mxu0 %v1099
    %1623 = vmatpush1.bf16.msra.mxu0 %v1098
    %1624 = vmatprep.subr.bf16.mxu0 %v1103
    %1625 = vmatpush1.bf16.msra.mxu0 %v1102
    %1626 = vmatprep.subr.bf16.mxu0 %v1107
    %1627 = vmatpush1.bf16.msra.mxu0 %v1106
    %1628 = vmatprep.subr.bf16.mxu0 %v1111
    %1629 = vmatpush1.bf16.msra.mxu0 %v1110
    %1630 = vmatprep.subr.bf16.mxu0 %v1115
    %1631 = vmatpush1.bf16.msra.mxu0 %v1114
    %1632 = vmatprep.subr.bf16.mxu0 %v1119
    %1633 = vmatpush1.bf16.msra.mxu0 %v1118
    %1634 = vmatprep.subr.bf16.mxu0 %v1123
    %1635 = vmatpush1.bf16.msra.mxu0 %v1122
    %1636 = vmatprep.subr.bf16.mxu0 %v1127
    %1637 = vmatpush1.bf16.msra.mxu0 %v1126
    %1638 = vmatprep.subr.bf16.mxu0 %v1131
    %1639 = vmatpush1.bf16.msra.mxu0 %v1130
    %1640 = vmatprep.subr.bf16.mxu0 %v1135
    %1641 = vmatpush1.bf16.msra.mxu0 %v1134
    %1642 = vmatprep.subr.bf16.mxu0 %v1139
    %1643 = vmatpush1.bf16.msra.mxu0 %v1138
    %1644 = vmatprep.subr.bf16.mxu0 %v1143
    %1645 = vmatpush1.bf16.msra.mxu0 %v1142
    %1646 = vmatprep.subr.bf16.mxu0 %v1147
    %1647 = vmatpush1.bf16.msra.mxu0 %v1146
    %1648 = vmatprep.subr.bf16.mxu0 %v1151
    %1649 = vmatpush1.bf16.msra.mxu0 %v1150
    %1650 = vmatprep.subr.bf16.mxu0 %v1155
    %1651 = vmatpush1.bf16.msra.mxu0 %v1154
    %1652 = vmatprep.subr.bf16.mxu0 %v1159
    %1653 = vmatpush1.bf16.msra.mxu0 %v1158
    %1654 = vmatprep.mubr.bf16.mxu0 %v160
    %1655 = vmatmul.mubr.bf16.gmra.mrb[0].mxu0 %v159
    %v1656 = vpop.f32.mrb[0].mxu0
    %v1657 = vadd.f32 %v1614, %v1656
    %v1658 = vpop.f32.mrb[0].mxu0
    %v1659 = vadd.f32 %v1616, %v1658
    %v1660 = vpop.f32.mrb[0].mxu0
    %v1661 = vadd.f32 %v1618, %v1660
    %v1662 = vpop.f32.mrb[0].mxu0
    %v1663 = vadd.f32 %v1620, %v1662
    %1664 = vdwg.mxu0
    %1665 = vmatprep.subr.bf16.mxu0 %v1163
    %1666 = vmatpush1.bf16.msra.mxu0 %v1162
    %1667 = vmatprep.subr.bf16.mxu0 0
    %1668 = vmatpush1.bf16.msra.mxu0 0
    %1669 = vmatprep.subr.bf16.mxu0 0
    %1670 = vmatpush1.bf16.msra.mxu0 0
    %1671 = vmatprep.subr.bf16.mxu0 0
    %1672 = vmatpush1.bf16.msra.mxu0 0
    %1673 = vmatprep.subr.bf16.mxu0 0
    %1674 = vmatpush1.bf16.msra.mxu0 0
    %1675 = vmatprep.subr.bf16.mxu0 0
    %1676 = vmatpush1.bf16.msra.mxu0 0
    %1677 = vmatprep.subr.bf16.mxu0 0
    %1678 = vmatpush1.bf16.msra.mxu0 0
    %1679 = vmatprep.subr.bf16.mxu0 0
    %1680 = vmatpush1.bf16.msra.mxu0 0
    %1681 = vmatprep.subr.bf16.mxu0 0
    %1682 = vmatpush1.bf16.msra.mxu0 0
    %1683 = vmatprep.subr.bf16.mxu0 0
    %1684 = vmatpush1.bf16.msra.mxu0 0
    %1685 = vmatprep.subr.bf16.mxu0 0
    %1686 = vmatpush1.bf16.msra.mxu0 0
    %1687 = vmatprep.subr.bf16.mxu0 0
    %1688 = vmatpush1.bf16.msra.mxu0 0
    %1689 = vmatprep.subr.bf16.mxu0 0
    %1690 = vmatpush1.bf16.msra.mxu0 0
    %1691 = vmatprep.subr.bf16.mxu0 0
    %1692 = vmatpush1.bf16.msra.mxu0 0
    %1693 = vmatprep.subr.bf16.mxu0 0
    %1694 = vmatpush1.bf16.msra.mxu0 0
    %1695 = vmatprep.subr.bf16.mxu0 0
    %1696 = vmatpush1.bf16.msra.mxu0 0
    %1697 = vmatprep.mubr.bf16.mxu0 0
    %1698 = vmatmul.mubr.bf16.gmra.mrb[0].mxu0 %v1362
    %v1699 = vpop.f32.mrb[0].mxu0
    %v1700 = vadd.f32 %v1657, %v1699
    %v1701 = vpop.f32.mrb[0].mxu0
    %v1702 = vadd.f32 %v1659, %v1701
    %v1703 = vpop.f32.mrb[0].mxu0
    %v1704 = vadd.f32 %v1661, %v1703
    %v1705 = vpop.f32.mrb[0].mxu0
    %v1706 = vadd.f32 %v1663, %v1705
    %1707 = vdwg.mxu0
    %v1708 = vmax.f32 %v1528, 0.0
    %v1709 = vmax.f32 %v1530, 0.0
    %v1710 = vmax.f32 %v1700, 0.0
    %v1711 = vmax.f32 %v1702, 0.0
    %v1712 = vmax.f32 %v1532, 0.0
    %v1713 = vmax.f32 %v1534, 0.0
    %v1714 = vmax.f32 %v1704, 0.0
    %v1715 = vmax.f32 %v1706, 0.0
    %v1716 = vpack.c.bf16 %v1712, %v1708
    %v1717 = vpack.c.bf16 %v1713, %v1709
    %v1718 = vpack.c.bf16 %v1714, %v1710
    %v1719 = vpack.c.bf16 %v1715, %v1711
    %v1720 = vld [vmem:[#allocation7] sm:$0xff]
    %v1721 = vld [vmem:[#allocation7 + $0x8] sm:$0xff]
    %v1722 = vld [vmem:[#allocation7 + $0x10] sm:$0xff]
    %v1723 = vld [vmem:[#allocation7 + $0x18] sm:$0xff]
    %v1724 = vld [vmem:[#allocation7 + $0x20] sm:$0xff]
    %v1725 = vld [vmem:[#allocation7 + $0x28] sm:$0xff]
    %v1726 = vld [vmem:[#allocation7 + $0x30] sm:$0xff]
    %v1727 = vld [vmem:[#allocation7 + $0x38] sm:$0xff]
    %v1728 = vld [vmem:[#allocation7 + $0x40] sm:$0xff]
    %v1729 = vld [vmem:[#allocation7 + $0x48] sm:$0xff]
    %v1730 = vld [vmem:[#allocation7 + $0x50] sm:$0xff]
    %v1731 = vld [vmem:[#allocation7 + $0x58] sm:$0xff]
    %v1732 = vld [vmem:[#allocation7 + $0x60] sm:$0xff]
    %v1733 = vld [vmem:[#allocation7 + $0x68] sm:$0xff]
    %v1734 = vld [vmem:[#allocation7 + $0x70] sm:$0xff]
    %v1735 = vld [vmem:[#allocation7 + $0x78] sm:$0xff]
    %v1736 = vld [vmem:[#allocation7 + $0x80] sm:$0xff]
    %v1737 = vld [vmem:[#allocation7 + $0x88] sm:$0xff]
    %v1738 = vld [vmem:[#allocation7 + $0x90] sm:$0xff]
    %v1739 = vld [vmem:[#allocation7 + $0x98] sm:$0xff]
    %v1740 = vld [vmem:[#allocation7 + $0xa0] sm:$0xff]
    %v1741 = vld [vmem:[#allocation7 + $0xa8] sm:$0xff]
    %v1742 = vld [vmem:[#allocation7 + $0xb0] sm:$0xff]
    %v1743 = vld [vmem:[#allocation7 + $0xb8] sm:$0xff]
    %v1744 = vld [vmem:[#allocation7 + $0xc0] sm:$0xff]
    %v1745 = vld [vmem:[#allocation7 + $0xc8] sm:$0xff]
    %v1746 = vld [vmem:[#allocation7 + $0xd0] sm:$0xff]
    %v1747 = vld [vmem:[#allocation7 + $0xd8] sm:$0xff]
    %v1748 = vld [vmem:[#allocation7 + $0xe0] sm:$0xff]
    %v1749 = vld [vmem:[#allocation7 + $0xe8] sm:$0xff]
    %v1750 = vld [vmem:[#allocation7 + $0xf0] sm:$0xff]
    %v1751 = vld [vmem:[#allocation7 + $0xf8] sm:$0xff]
    %v1752 = vld [vmem:[#allocation7 + $0x100] sm:$0xff]
    %v1753 = vld [vmem:[#allocation7 + $0x108] sm:$0xff]
    %v1754 = vld [vmem:[#allocation7 + $0x110] sm:$0xff]
    %v1755 = vld [vmem:[#allocation7 + $0x118] sm:$0xff]
    %v1756 = vld [vmem:[#allocation7 + $0x120] sm:$0xff]
    %v1757 = vld [vmem:[#allocation7 + $0x128] sm:$0xff]
    %v1758 = vld [vmem:[#allocation7 + $0x130] sm:$0xff]
    %v1759 = vld [vmem:[#allocation7 + $0x138] sm:$0xff]
    %v1760 = vld [vmem:[#allocation7 + $0x140] sm:$0xff]
    %v1761 = vld [vmem:[#allocation7 + $0x148] sm:$0xff]
    %v1762 = vld [vmem:[#allocation7 + $0x150] sm:$0xff]
    %v1763 = vld [vmem:[#allocation7 + $0x158] sm:$0xff]
    %v1764 = vld [vmem:[#allocation7 + $0x160] sm:$0xff]
    %v1765 = vld [vmem:[#allocation7 + $0x168] sm:$0xff]
    %v1766 = vld [vmem:[#allocation7 + $0x170] sm:$0xff]
    %v1767 = vld [vmem:[#allocation7 + $0x178] sm:$0xff]
    %v1768 = vld [vmem:[#allocation7 + $0x180] sm:$0xff]
    %v1769 = vld [vmem:[#allocation7 + $0x188] sm:$0xff]
    %v1770 = vld [vmem:[#allocation7 + $0x190] sm:$0xff]
    %v1771 = vld [vmem:[#allocation7 + $0x198] sm:$0xff]
    %v1772 = vld [vmem:[#allocation7 + $0x1a0] sm:$0xff]
    %v1773 = vld [vmem:[#allocation7 + $0x1a8] sm:$0xff]
    %v1774 = vld [vmem:[#allocation7 + $0x1b0] sm:$0xff]
    %v1775 = vld [vmem:[#allocation7 + $0x1b8] sm:$0xff]
    %v1776 = vld [vmem:[#allocation7 + $0x1c0] sm:$0xff]
    %v1777 = vld [vmem:[#allocation7 + $0x1c8] sm:$0xff]
    %v1778 = vld [vmem:[#allocation7 + $0x1d0] sm:$0xff]
    %v1779 = vld [vmem:[#allocation7 + $0x1d8] sm:$0xff]
    %v1780 = vld [vmem:[#allocation7 + $0x1e0] sm:$0xff]
    %v1781 = vld [vmem:[#allocation7 + $0x1e8] sm:$0xff]
    %v1782 = vld [vmem:[#allocation7 + $0x1f0] sm:$0xff]
    %v1783 = vld [vmem:[#allocation7 + $0x1f8] sm:$0xff]
    %v1784 = vld [vmem:[%s4] sm:$0x3]
    %v1786 = vlaneseq
    %v1787 = vshrl.u32 %v1786, 7
    %v1788 = vsub.s32 0, %v1787
    %v1789 = vrot.slane %v1784, %v1788
    %v1790 = vlaneseq
    %v1791 = vshrl.u32 %v1790, 7
    %v1792 = vsub.s32 1, %v1791
    %v1793 = vrot.slane %v1784, %v1792
    %v1860 = vunpack.c.l.b16 %v1720
    %v1861 = vunpack.c.h.b16 %v1720
    %v1862 = vunpack.c.l.b16 %v1721
    %v1863 = vunpack.c.h.b16 %v1721
    %v1864 = vunpack.c.l.b16 %v1722
    %v1865 = vunpack.c.h.b16 %v1722
    %v1866 = vunpack.c.l.b16 %v1723
    %v1867 = vunpack.c.h.b16 %v1723
    %v1868 = vunpack.c.l.b16 %v1724
    %v1869 = vunpack.c.h.b16 %v1724
    %v1870 = vunpack.c.l.b16 %v1725
    %v1871 = vunpack.c.h.b16 %v1725
    %v1872 = vunpack.c.l.b16 %v1726
    %v1873 = vunpack.c.h.b16 %v1726
    %v1874 = vunpack.c.l.b16 %v1727
    %v1875 = vunpack.c.h.b16 %v1727
    %v1876 = vunpack.c.l.b16 %v1728
    %v1877 = vunpack.c.h.b16 %v1728
    %v1878 = vunpack.c.l.b16 %v1729
    %v1879 = vunpack.c.h.b16 %v1729
    %v1880 = vunpack.c.l.b16 %v1730
    %v1881 = vunpack.c.h.b16 %v1730
    %v1882 = vunpack.c.l.b16 %v1731
    %v1883 = vunpack.c.h.b16 %v1731
    %v1884 = vunpack.c.l.b16 %v1732
    %v1885 = vunpack.c.h.b16 %v1732
    %v1886 = vunpack.c.l.b16 %v1733
    %v1887 = vunpack.c.h.b16 %v1733
    %v1888 = vunpack.c.l.b16 %v1734
    %v1889 = vunpack.c.h.b16 %v1734
    %v1890 = vunpack.c.l.b16 %v1735
    %v1891 = vunpack.c.h.b16 %v1735
    %v1892 = vunpack.c.l.b16 %v1736
    %v1893 = vunpack.c.h.b16 %v1736
    %v1894 = vunpack.c.l.b16 %v1737
    %v1895 = vunpack.c.h.b16 %v1737
    %v1896 = vunpack.c.l.b16 %v1738
    %v1897 = vunpack.c.h.b16 %v1738
    %v1898 = vunpack.c.l.b16 %v1739
    %v1899 = vunpack.c.h.b16 %v1739
    %v1900 = vunpack.c.l.b16 %v1740
    %v1901 = vunpack.c.h.b16 %v1740
    %v1902 = vunpack.c.l.b16 %v1741
    %v1903 = vunpack.c.h.b16 %v1741
    %v1904 = vunpack.c.l.b16 %v1742
    %v1905 = vunpack.c.h.b16 %v1742
    %v1906 = vunpack.c.l.b16 %v1743
    %v1907 = vunpack.c.h.b16 %v1743
    %v1908 = vunpack.c.l.b16 %v1744
    %v1909 = vunpack.c.h.b16 %v1744
    %v1910 = vunpack.c.l.b16 %v1745
    %v1911 = vunpack.c.h.b16 %v1745
    %v1912 = vunpack.c.l.b16 %v1746
    %v1913 = vunpack.c.h.b16 %v1746
    %v1914 = vunpack.c.l.b16 %v1747
    %v1915 = vunpack.c.h.b16 %v1747
    %v1916 = vunpack.c.l.b16 %v1748
    %v1917 = vunpack.c.h.b16 %v1748
    %v1918 = vunpack.c.l.b16 %v1749
    %v1919 = vunpack.c.h.b16 %v1749
    %v1920 = vunpack.c.l.b16 %v1750
    %v1921 = vunpack.c.h.b16 %v1750
    %v1922 = vunpack.c.l.b16 %v1751
    %v1923 = vunpack.c.h.b16 %v1751
    %v1924 = vunpack.c.l.b16 %v1752
    %v1925 = vunpack.c.h.b16 %v1752
    %v1926 = vunpack.c.l.b16 %v1753
    %v1927 = vunpack.c.h.b16 %v1753
    %v1928 = vunpack.c.l.b16 %v1754
    %v1929 = vunpack.c.h.b16 %v1754
    %v1930 = vunpack.c.l.b16 %v1755
    %v1931 = vunpack.c.h.b16 %v1755
    %v1932 = vunpack.c.l.b16 %v1756
    %v1933 = vunpack.c.h.b16 %v1756
    %v1934 = vunpack.c.l.b16 %v1757
    %v1935 = vunpack.c.h.b16 %v1757
    %v1936 = vunpack.c.l.b16 %v1758
    %v1937 = vunpack.c.h.b16 %v1758
    %v1938 = vunpack.c.l.b16 %v1759
    %v1939 = vunpack.c.h.b16 %v1759
    %v1940 = vunpack.c.l.b16 %v1760
    %v1941 = vunpack.c.h.b16 %v1760
    %v1942 = vunpack.c.l.b16 %v1761
    %v1943 = vunpack.c.h.b16 %v1761
    %v1944 = vunpack.c.l.b16 %v1762
    %v1945 = vunpack.c.h.b16 %v1762
    %v1946 = vunpack.c.l.b16 %v1763
    %v1947 = vunpack.c.h.b16 %v1763
    %v1948 = vunpack.c.l.b16 %v1764
    %v1949 = vunpack.c.h.b16 %v1764
    %v1950 = vunpack.c.l.b16 %v1765
    %v1951 = vunpack.c.h.b16 %v1765
    %v1952 = vunpack.c.l.b16 %v1766
    %v1953 = vunpack.c.h.b16 %v1766
    %v1954 = vunpack.c.l.b16 %v1767
    %v1955 = vunpack.c.h.b16 %v1767
    %v1956 = vunpack.c.l.b16 %v1768
    %v1957 = vunpack.c.h.b16 %v1768
    %v1958 = vunpack.c.l.b16 %v1769
    %v1959 = vunpack.c.h.b16 %v1769
    %v1960 = vunpack.c.l.b16 %v1770
    %v1961 = vunpack.c.h.b16 %v1770
    %v1962 = vunpack.c.l.b16 %v1771
    %v1963 = vunpack.c.h.b16 %v1771
    %v1964 = vunpack.c.l.b16 %v1772
    %v1965 = vunpack.c.h.b16 %v1772
    %v1966 = vunpack.c.l.b16 %v1773
    %v1967 = vunpack.c.h.b16 %v1773
    %v1968 = vunpack.c.l.b16 %v1774
    %v1969 = vunpack.c.h.b16 %v1774
    %v1970 = vunpack.c.l.b16 %v1775
    %v1971 = vunpack.c.h.b16 %v1775
    %v1972 = vunpack.c.l.b16 %v1776
    %v1973 = vunpack.c.h.b16 %v1776
    %v1974 = vunpack.c.l.b16 %v1777
    %v1975 = vunpack.c.h.b16 %v1777
    %v1976 = vunpack.c.l.b16 %v1778
    %v1977 = vunpack.c.h.b16 %v1778
    %v1978 = vunpack.c.l.b16 %v1779
    %v1979 = vunpack.c.h.b16 %v1779
    %v1980 = vunpack.c.l.b16 %v1780
    %v1981 = vunpack.c.h.b16 %v1780
    %v1982 = vunpack.c.l.b16 %v1781
    %v1983 = vunpack.c.h.b16 %v1781
    %v1984 = vunpack.c.l.b16 %v1782
    %v1985 = vunpack.c.h.b16 %v1782
    %v1986 = vunpack.c.l.b16 %v1783
    %v1987 = vunpack.c.h.b16 %v1783
    %v1988 = vpack.c.b16 %v1862, %v1860
    %v1989 = vpack.c.b16 %v1863, %v1861
    %v1990 = vpack.c.b16 %v1866, %v1864
    %v1991 = vpack.c.b16 %v1867, %v1865
    %v1992 = vpack.c.b16 %v1870, %v1868
    %v1993 = vpack.c.b16 %v1871, %v1869
    %v1994 = vpack.c.b16 %v1874, %v1872
    %v1995 = vpack.c.b16 %v1875, %v1873
    %v1996 = vpack.c.b16 %v1878, %v1876
    %v1997 = vpack.c.b16 %v1879, %v1877
    %v1998 = vpack.c.b16 %v1882, %v1880
    %v1999 = vpack.c.b16 %v1883, %v1881
    %v2000 = vpack.c.b16 %v1886, %v1884
    %v2001 = vpack.c.b16 %v1887, %v1885
    %v2002 = vpack.c.b16 %v1890, %v1888
    %v2003 = vpack.c.b16 %v1891, %v1889
    %v2004 = vpack.c.b16 %v1894, %v1892
    %v2005 = vpack.c.b16 %v1895, %v1893
    %v2006 = vpack.c.b16 %v1898, %v1896
    %v2007 = vpack.c.b16 %v1899, %v1897
    %v2008 = vpack.c.b16 %v1902, %v1900
    %v2009 = vpack.c.b16 %v1903, %v1901
    %v2010 = vpack.c.b16 %v1906, %v1904
    %v2011 = vpack.c.b16 %v1907, %v1905
    %v2012 = vpack.c.b16 %v1910, %v1908
    %v2013 = vpack.c.b16 %v1911, %v1909
    %v2014 = vpack.c.b16 %v1914, %v1912
    %v2015 = vpack.c.b16 %v1915, %v1913
    %v2016 = vpack.c.b16 %v1918, %v1916
    %v2017 = vpack.c.b16 %v1919, %v1917
    %v2018 = vpack.c.b16 %v1922, %v1920
    %v2019 = vpack.c.b16 %v1923, %v1921
    %v2020 = vpack.c.b16 %v1926, %v1924
    %v2021 = vpack.c.b16 %v1927, %v1925
    %v2022 = vpack.c.b16 %v1930, %v1928
    %v2023 = vpack.c.b16 %v1931, %v1929
    %v2024 = vpack.c.b16 %v1934, %v1932
    %v2025 = vpack.c.b16 %v1935, %v1933
    %v2026 = vpack.c.b16 %v1938, %v1936
    %v2027 = vpack.c.b16 %v1939, %v1937
    %v2028 = vpack.c.b16 %v1942, %v1940
    %v2029 = vpack.c.b16 %v1943, %v1941
    %v2030 = vpack.c.b16 %v1946, %v1944
    %v2031 = vpack.c.b16 %v1947, %v1945
    %v2032 = vpack.c.b16 %v1950, %v1948
    %v2033 = vpack.c.b16 %v1951, %v1949
    %v2034 = vpack.c.b16 %v1954, %v1952
    %v2035 = vpack.c.b16 %v1955, %v1953
    %v2036 = vpack.c.b16 %v1958, %v1956
    %v2037 = vpack.c.b16 %v1959, %v1957
    %v2038 = vpack.c.b16 %v1962, %v1960
    %v2039 = vpack.c.b16 %v1963, %v1961
    %v2040 = vpack.c.b16 %v1966, %v1964
    %v2041 = vpack.c.b16 %v1967, %v1965
    %v2042 = vpack.c.b16 %v1970, %v1968
    %v2043 = vpack.c.b16 %v1971, %v1969
    %v2044 = vpack.c.b16 %v1974, %v1972
    %v2045 = vpack.c.b16 %v1975, %v1973
    %v2046 = vpack.c.b16 %v1978, %v1976
    %v2047 = vpack.c.b16 %v1979, %v1977
    %v2048 = vpack.c.b16 %v1982, %v1980
    %v2049 = vpack.c.b16 %v1983, %v1981
    %v2050 = vpack.c.b16 %v1986, %v1984
    %v2051 = vpack.c.b16 %v1987, %v1985
    %2116 = vmatprep.subr.bf16.mxu0 %v1989
    %2117 = vmatpush1.bf16.msra.mxu0 %v1988
    %2118 = vmatprep.subr.bf16.mxu0 %v1991
    %2119 = vmatpush1.bf16.msra.mxu0 %v1990
    %2120 = vmatprep.subr.bf16.mxu0 %v1993
    %2121 = vmatpush1.bf16.msra.mxu0 %v1992
    %2122 = vmatprep.subr.bf16.mxu0 %v1995
    %2123 = vmatpush1.bf16.msra.mxu0 %v1994
    %2124 = vmatprep.subr.bf16.mxu0 %v1997
    %2125 = vmatpush1.bf16.msra.mxu0 %v1996
    %2126 = vmatprep.subr.bf16.mxu0 %v1999
    %2127 = vmatpush1.bf16.msra.mxu0 %v1998
    %2128 = vmatprep.subr.bf16.mxu0 %v2001
    %2129 = vmatpush1.bf16.msra.mxu0 %v2000
    %2130 = vmatprep.subr.bf16.mxu0 %v2003
    %2131 = vmatpush1.bf16.msra.mxu0 %v2002
    %2132 = vmatprep.subr.bf16.mxu0 %v2005
    %2133 = vmatpush1.bf16.msra.mxu0 %v2004
    %2134 = vmatprep.subr.bf16.mxu0 %v2007
    %2135 = vmatpush1.bf16.msra.mxu0 %v2006
    %2136 = vmatprep.subr.bf16.mxu0 %v2009
    %2137 = vmatpush1.bf16.msra.mxu0 %v2008
    %2138 = vmatprep.subr.bf16.mxu0 %v2011
    %2139 = vmatpush1.bf16.msra.mxu0 %v2010
    %2140 = vmatprep.subr.bf16.mxu0 %v2013
    %2141 = vmatpush1.bf16.msra.mxu0 %v2012
    %2142 = vmatprep.subr.bf16.mxu0 %v2015
    %2143 = vmatpush1.bf16.msra.mxu0 %v2014
    %2144 = vmatprep.subr.bf16.mxu0 %v2017
    %2145 = vmatpush1.bf16.msra.mxu0 %v2016
    %2146 = vmatprep.subr.bf16.mxu0 %v2019
    %2147 = vmatpush1.bf16.msra.mxu0 %v2018
    %2148 = vmatprep.mubr.bf16.mxu0 %v1717
    %2149 = vmatmul.mubr.bf16.gmra.mrb[0].mxu0 %v1716
    %v2150 = vpop.f32.mrb[0].mxu0
    %v2151 = vadd.f32 %v1789, %v2150
    %v2152 = vpop.f32.mrb[0].mxu0
    %v2153 = vadd.f32 %v1793, %v2152
    %v2154 = vpop.f32.mrb[0].mxu0
    %v2155 = vadd.f32 %v1789, %v2154
    %v2156 = vpop.f32.mrb[0].mxu0
    %v2157 = vadd.f32 %v1793, %v2156
    %2158 = vdwg.mxu0
    %2159 = vmatprep.subr.bf16.mxu0 %v2021
    %2160 = vmatpush1.bf16.msra.mxu0 %v2020
    %2161 = vmatprep.subr.bf16.mxu0 %v2023
    %2162 = vmatpush1.bf16.msra.mxu0 %v2022
    %2163 = vmatprep.subr.bf16.mxu0 %v2025
    %2164 = vmatpush1.bf16.msra.mxu0 %v2024
    %2165 = vmatprep.subr.bf16.mxu0 %v2027
    %2166 = vmatpush1.bf16.msra.mxu0 %v2026
    %2167 = vmatprep.subr.bf16.mxu0 %v2029
    %2168 = vmatpush1.bf16.msra.mxu0 %v2028
    %2169 = vmatprep.subr.bf16.mxu0 %v2031
    %2170 = vmatpush1.bf16.msra.mxu0 %v2030
    %2171 = vmatprep.subr.bf16.mxu0 %v2033
    %2172 = vmatpush1.bf16.msra.mxu0 %v2032
    %2173 = vmatprep.subr.bf16.mxu0 %v2035
    %2174 = vmatpush1.bf16.msra.mxu0 %v2034
    %2175 = vmatprep.subr.bf16.mxu0 %v2037
    %2176 = vmatpush1.bf16.msra.mxu0 %v2036
    %2177 = vmatprep.subr.bf16.mxu0 %v2039
    %2178 = vmatpush1.bf16.msra.mxu0 %v2038
    %2179 = vmatprep.subr.bf16.mxu0 %v2041
    %2180 = vmatpush1.bf16.msra.mxu0 %v2040
    %2181 = vmatprep.subr.bf16.mxu0 %v2043
    %2182 = vmatpush1.bf16.msra.mxu0 %v2042
    %2183 = vmatprep.subr.bf16.mxu0 %v2045
    %2184 = vmatpush1.bf16.msra.mxu0 %v2044
    %2185 = vmatprep.subr.bf16.mxu0 %v2047
    %2186 = vmatpush1.bf16.msra.mxu0 %v2046
    %2187 = vmatprep.subr.bf16.mxu0 %v2049
    %2188 = vmatpush1.bf16.msra.mxu0 %v2048
    %2189 = vmatprep.subr.bf16.mxu0 %v2051
    %2190 = vmatpush1.bf16.msra.mxu0 %v2050
    %2191 = vmatprep.mubr.bf16.mxu0 %v1719
    %2192 = vmatmul.mubr.bf16.gmra.mrb[0].mxu0 %v1718
    %v2193 = vpop.f32.mrb[0].mxu0
    %v2194 = vadd.f32 %v2151, %v2193
    %v2195 = vpop.f32.mrb[0].mxu0
    %v2196 = vadd.f32 %v2153, %v2195
    %v2197 = vpop.f32.mrb[0].mxu0
    %v2198 = vadd.f32 %v2155, %v2197
    %v2199 = vpop.f32.mrb[0].mxu0
    %v2200 = vadd.f32 %v2157, %v2199
    %2201 = vdwg.mxu0
    %v2202 = vmax.f32 %v2194, 0.0
    %v2203 = vmax.f32 %v2196, 0.0
    %v2204 = vmax.f32 %v2198, 0.0
    %v2205 = vmax.f32 %v2200, 0.0
    %v2206 = vpack.c.bf16 %v2204, %v2202
    %v2207 = vpack.c.bf16 %v2205, %v2203
    %v2208 = vld [vmem:[#allocation8] sm:$0xf]
    %v2209 = vld [vmem:[#allocation8 + $0x4] sm:$0xf]
    %v2210 = vld [vmem:[#allocation8 + $0x8] sm:$0xf]
    %v2211 = vld [vmem:[#allocation8 + $0xc] sm:$0xf]
    %v2212 = vld [vmem:[#allocation8 + $0x10] sm:$0xf]
    %v2213 = vld [vmem:[#allocation8 + $0x14] sm:$0xf]
    %v2214 = vld [vmem:[#allocation8 + $0x18] sm:$0xf]
    %v2215 = vld [vmem:[#allocation8 + $0x1c] sm:$0xf]
    %v2216 = vld [vmem:[#allocation8 + $0x20] sm:$0xf]
    %v2217 = vld [vmem:[#allocation8 + $0x24] sm:$0xf]
    %v2218 = vld [vmem:[#allocation8 + $0x28] sm:$0xf]
    %v2219 = vld [vmem:[#allocation8 + $0x2c] sm:$0xf]
    %v2220 = vld [vmem:[#allocation8 + $0x30] sm:$0xf]
    %v2221 = vld [vmem:[#allocation8 + $0x34] sm:$0xf]
    %v2222 = vld [vmem:[#allocation8 + $0x38] sm:$0xf]
    %v2223 = vld [vmem:[#allocation8 + $0x3c] sm:$0xf]
    %v2224 = vld [vmem:[#allocation8 + $0x40] sm:$0xf]
    %v2225 = vld [vmem:[#allocation8 + $0x44] sm:$0xf]
    %v2226 = vld [vmem:[#allocation8 + $0x48] sm:$0xf]
    %v2227 = vld [vmem:[#allocation8 + $0x4c] sm:$0xf]
    %v2228 = vld [vmem:[#allocation8 + $0x50] sm:$0xf]
    %v2229 = vld [vmem:[#allocation8 + $0x54] sm:$0xf]
    %v2230 = vld [vmem:[#allocation8 + $0x58] sm:$0xf]
    %v2231 = vld [vmem:[#allocation8 + $0x5c] sm:$0xf]
    %v2232 = vld [vmem:[#allocation8 + $0x60] sm:$0xf]
    %v2233 = vld [vmem:[#allocation8 + $0x64] sm:$0xf]
    %v2234 = vld [vmem:[#allocation8 + $0x68] sm:$0xf]
    %v2235 = vld [vmem:[#allocation8 + $0x6c] sm:$0xf]
    %v2236 = vld [vmem:[#allocation8 + $0x70] sm:$0xf]
    %v2237 = vld [vmem:[#allocation8 + $0x74] sm:$0xf]
    %v2238 = vld [vmem:[#allocation8 + $0x78] sm:$0xf]
    %v2239 = vld [vmem:[#allocation8 + $0x7c] sm:$0xf]
    %v2240 = vld [vmem:[%s6] sm:$0x1]
    %v2242 = vlaneseq
    %v2243 = vshrl.u32 %v2242, 7
    %v2244 = vsub.s32 0, %v2243
    %v2245 = vrot.slane %v2240, %v2244
    %v2279 = vunpack.c.l.b16 %v2208
    %v2280 = vunpack.c.l.b16 %v2209
    %v2281 = vunpack.c.l.b16 %v2210
    %v2282 = vunpack.c.l.b16 %v2211
    %v2283 = vunpack.c.l.b16 %v2212
    %v2284 = vunpack.c.l.b16 %v2213
    %v2285 = vunpack.c.l.b16 %v2214
    %v2286 = vunpack.c.l.b16 %v2215
    %v2287 = vunpack.c.l.b16 %v2216
    %v2288 = vunpack.c.l.b16 %v2217
    %v2289 = vunpack.c.l.b16 %v2218
    %v2290 = vunpack.c.l.b16 %v2219
    %v2291 = vunpack.c.l.b16 %v2220
    %v2292 = vunpack.c.l.b16 %v2221
    %v2293 = vunpack.c.l.b16 %v2222
    %v2294 = vunpack.c.l.b16 %v2223
    %v2295 = vunpack.c.l.b16 %v2224
    %v2296 = vunpack.c.l.b16 %v2225
    %v2297 = vunpack.c.l.b16 %v2226
    %v2298 = vunpack.c.l.b16 %v2227
    %v2299 = vunpack.c.l.b16 %v2228
    %v2300 = vunpack.c.l.b16 %v2229
    %v2301 = vunpack.c.l.b16 %v2230
    %v2302 = vunpack.c.l.b16 %v2231
    %v2303 = vunpack.c.l.b16 %v2232
    %v2304 = vunpack.c.l.b16 %v2233
    %v2305 = vunpack.c.l.b16 %v2234
    %v2306 = vunpack.c.l.b16 %v2235
    %v2307 = vunpack.c.l.b16 %v2236
    %v2308 = vunpack.c.l.b16 %v2237
    %v2309 = vunpack.c.l.b16 %v2238
    %v2310 = vunpack.c.l.b16 %v2239
    %v2311 = vpack.c.b16 %v2280, %v2279
    %v2312 = vpack.c.b16 %v2282, %v2281
    %v2313 = vpack.c.b16 %v2284, %v2283
    %v2314 = vpack.c.b16 %v2286, %v2285
    %v2315 = vpack.c.b16 %v2288, %v2287
    %v2316 = vpack.c.b16 %v2290, %v2289
    %v2317 = vpack.c.b16 %v2292, %v2291
    %v2318 = vpack.c.b16 %v2294, %v2293
    %v2319 = vpack.c.b16 %v2296, %v2295
    %v2320 = vpack.c.b16 %v2298, %v2297
    %v2321 = vpack.c.b16 %v2300, %v2299
    %v2322 = vpack.c.b16 %v2302, %v2301
    %v2323 = vpack.c.b16 %v2304, %v2303
    %v2324 = vpack.c.b16 %v2306, %v2305
    %v2325 = vpack.c.b16 %v2308, %v2307
    %v2326 = vpack.c.b16 %v2310, %v2309
    %2343 = vmatprep.subr.bf16.mxu0 0
    %2344 = vmatpush1.bf16.msra.mxu0 %v2311
    %2345 = vmatprep.subr.bf16.mxu0 0
    %2346 = vmatpush1.bf16.msra.mxu0 %v2312
    %2347 = vmatprep.subr.bf16.mxu0 0
    %2348 = vmatpush1.bf16.msra.mxu0 %v2313
    %2349 = vmatprep.subr.bf16.mxu0 0
    %2350 = vmatpush1.bf16.msra.mxu0 %v2314
    %2351 = vmatprep.subr.bf16.mxu0 0
    %2352 = vmatpush1.bf16.msra.mxu0 %v2315
    %2353 = vmatprep.subr.bf16.mxu0 0
    %2354 = vmatpush1.bf16.msra.mxu0 %v2316
    %2355 = vmatprep.subr.bf16.mxu0 0
    %2356 = vmatpush1.bf16.msra.mxu0 %v2317
    %2357 = vmatprep.subr.bf16.mxu0 0
    %2358 = vmatpush1.bf16.msra.mxu0 %v2318
    %2359 = vmatprep.subr.bf16.mxu0 0
    %2360 = vmatpush1.bf16.msra.mxu0 %v2319
    %2361 = vmatprep.subr.bf16.mxu0 0
    %2362 = vmatpush1.bf16.msra.mxu0 %v2320
    %2363 = vmatprep.subr.bf16.mxu0 0
    %2364 = vmatpush1.bf16.msra.mxu0 %v2321
    %2365 = vmatprep.subr.bf16.mxu0 0
    %2366 = vmatpush1.bf16.msra.mxu0 %v2322
    %2367 = vmatprep.subr.bf16.mxu0 0
    %2368 = vmatpush1.bf16.msra.mxu0 %v2323
    %2369 = vmatprep.subr.bf16.mxu0 0
    %2370 = vmatpush1.bf16.msra.mxu0 %v2324
    %2371 = vmatprep.subr.bf16.mxu0 0
    %2372 = vmatpush1.bf16.msra.mxu0 %v2325
    %2373 = vmatprep.subr.bf16.mxu0 0
    %2374 = vmatpush1.bf16.msra.mxu0 %v2326
    %2375 = vmatprep.mubr.bf16.mxu0 %v2207
    %2376 = vmatmul.mubr.bf16.gmra.mrb[0].mxu0 %v2206
    %v2377 = vpop.f32.mrb[0].mxu0
    %v2378 = vadd.f32 %v2245, %v2377
    %v2379 = vpop.f32.mrb[0].mxu0
    %v2380 = vpop.f32.mrb[0].mxu0
    %v2381 = vadd.f32 %v2245, %v2380
    %v2382 = vpop.f32.mrb[0].mxu0
    %2383 = vdwg.mxu0
    %v2384 = vmax.f32 %v2378, 0.0
    %v2385 = vmax.f32 %v2381, 0.0
    %v2386 = vpack.c.bf16 %v2385, %v2384
    %v2387 = vld [vmem:[#allocation10] sm:$0xf]
    %v2388 = vld [vmem:[#allocation10 + $0x4] sm:$0xf]
    %v2389 = vld [vmem:[#allocation10 + $0x8] sm:$0xf]
    %v2390 = vld [vmem:[#allocation10 + $0xc] sm:$0xf]
    %v2391 = vld [vmem:[#allocation10 + $0x10] sm:$0xf]
    %v2392 = vld [vmem:[#allocation10 + $0x14] sm:$0xf]
    %v2393 = vld [vmem:[#allocation10 + $0x18] sm:$0xf]
    %v2394 = vld [vmem:[#allocation10 + $0x1c] sm:$0xf]
    %v2395 = vld [vmem:[#allocation10 + $0x20] sm:$0xf]
    %v2396 = vld [vmem:[#allocation10 + $0x24] sm:$0xf]
    %v2397 = vld [vmem:[#allocation10 + $0x28] sm:$0xf]
    %v2398 = vld [vmem:[#allocation10 + $0x2c] sm:$0xf]
    %v2399 = vld [vmem:[#allocation10 + $0x30] sm:$0xf]
    %v2400 = vld [vmem:[#allocation10 + $0x34] sm:$0xf]
    %v2401 = vld [vmem:[#allocation10 + $0x38] sm:$0xf]
    %v2402 = vld [vmem:[#allocation10 + $0x3c] sm:$0xf]
    %v2403 = vld [vmem:[%s8] sm:$0x1]
    %v2405 = vlaneseq
    %v2406 = vshrl.u32 %v2405, 7
    %v2407 = vsub.s32 0, %v2406
    %v2408 = vrot.slane %v2403, %v2407
    %v2426 = vunpack.c.l.b16 %v2387
    %v2427 = vunpack.c.l.b16 %v2388
    %v2428 = vunpack.c.l.b16 %v2389
    %v2429 = vunpack.c.l.b16 %v2390
    %v2430 = vunpack.c.l.b16 %v2391
    %v2431 = vunpack.c.l.b16 %v2392
    %v2432 = vunpack.c.l.b16 %v2393
    %v2433 = vunpack.c.l.b16 %v2394
    %v2434 = vunpack.c.l.b16 %v2395
    %v2435 = vunpack.c.l.b16 %v2396
    %v2436 = vunpack.c.l.b16 %v2397
    %v2437 = vunpack.c.l.b16 %v2398
    %v2438 = vunpack.c.l.b16 %v2399
    %v2439 = vunpack.c.l.b16 %v2400
    %v2440 = vunpack.c.l.b16 %v2401
    %v2441 = vunpack.c.l.b16 %v2402
    %v2442 = vpack.c.b16 %v2427, %v2426
    %v2443 = vpack.c.b16 %v2429, %v2428
    %v2444 = vpack.c.b16 %v2431, %v2430
    %v2445 = vpack.c.b16 %v2433, %v2432
    %v2446 = vpack.c.b16 %v2435, %v2434
    %v2447 = vpack.c.b16 %v2437, %v2436
    %v2448 = vpack.c.b16 %v2439, %v2438
    %v2449 = vpack.c.b16 %v2441, %v2440
    %2458 = vmatprep.subr.bf16.mxu0 0
    %2459 = vmatpush1.bf16.msra.mxu0 %v2442
    %2460 = vmatprep.subr.bf16.mxu0 0
    %2461 = vmatpush1.bf16.msra.mxu0 %v2443
    %2462 = vmatprep.subr.bf16.mxu0 0
    %2463 = vmatpush1.bf16.msra.mxu0 %v2444
    %2464 = vmatprep.subr.bf16.mxu0 0
    %2465 = vmatpush1.bf16.msra.mxu0 %v2445
    %2466 = vmatprep.subr.bf16.mxu0 0
    %2467 = vmatpush1.bf16.msra.mxu0 %v2446
    %2468 = vmatprep.subr.bf16.mxu0 0
    %2469 = vmatpush1.bf16.msra.mxu0 %v2447
    %2470 = vmatprep.subr.bf16.mxu0 0
    %2471 = vmatpush1.bf16.msra.mxu0 %v2448
    %2472 = vmatprep.subr.bf16.mxu0 0
    %2473 = vmatpush1.bf16.msra.mxu0 %v2449
    %2474 = vmatprep.subr.bf16.mxu0 0
    %2475 = vmatpush1.bf16.msra.mxu0 0
    %2476 = vmatprep.subr.bf16.mxu0 0
    %2477 = vmatpush1.bf16.msra.mxu0 0
    %2478 = vmatprep.subr.bf16.mxu0 0
    %2479 = vmatpush1.bf16.msra.mxu0 0
    %2480 = vmatprep.subr.bf16.mxu0 0
    %2481 = vmatpush1.bf16.msra.mxu0 0
    %2482 = vmatprep.subr.bf16.mxu0 0
    %2483 = vmatpush1.bf16.msra.mxu0 0
    %2484 = vmatprep.subr.bf16.mxu0 0
    %2485 = vmatpush1.bf16.msra.mxu0 0
    %2486 = vmatprep.subr.bf16.mxu0 0
    %2487 = vmatpush1.bf16.msra.mxu0 0
    %2488 = vmatprep.subr.bf16.mxu0 0
    %2489 = vmatpush1.bf16.msra.mxu0 0
    %2490 = vmatprep.mubr.bf16.mxu0 0
    %2491 = vmatmul.mubr.bf16.gmra.mrb[0].mxu0 %v2386
    %v2492 = vpop.f32.mrb[0].mxu0
    %v2493 = vadd.f32 %v2408, %v2492
    %v2494 = vpop.f32.mrb[0].mxu0
    %v2495 = vpop.f32.mrb[0].mxu0
    %v2496 = vadd.f32 %v2408, %v2495
    %v2497 = vpop.f32.mrb[0].mxu0
    %2498 = vdwg.mxu0
    %v2499 = vmax.f32 %v2493, 0.0
    %v2500 = vmax.f32 %v2496, 0.0
    %v2501 = vpack.c.bf16 %v2500, %v2499
    %v2502 = vld [vmem:[#allocation11] sm:$0xf]
    %v2503 = vld [vmem:[#allocation11 + $0x4] sm:$0xf]
    %v2504 = vld [vmem:[#allocation11 + $0x8] sm:$0xf]
    %v2505 = vld [vmem:[#allocation11 + $0xc] sm:$0xf]
    %v2506 = vld [vmem:[#allocation11 + $0x10] sm:$0xf]
    %v2507 = vld [vmem:[#allocation11 + $0x14] sm:$0xf]
    %v2508 = vld [vmem:[#allocation11 + $0x18] sm:$0xf]
    %v2509 = vld [vmem:[#allocation11 + $0x1c] sm:$0xf]
    %v2510 = vld [vmem:[#allocation11 + $0x20] sm:$0xf]
    %v2511 = vld [vmem:[#allocation11 + $0x24] sm:$0xf]
    %v2512 = vld [vmem:[#allocation11 + $0x28] sm:$0xf]
    %v2513 = vld [vmem:[#allocation11 + $0x2c] sm:$0xf]
    %v2514 = vld [vmem:[#allocation11 + $0x30] sm:$0xf]
    %v2515 = vld [vmem:[#allocation11 + $0x34] sm:$0xf]
    %v2516 = vld [vmem:[#allocation11 + $0x38] sm:$0xf]
    %v2517 = vld [vmem:[#allocation11 + $0x3c] sm:$0xf]
    %v2518 = vld [vmem:[%s10] sm:$0x1]
    %v2520 = vlaneseq
    %v2521 = vshrl.u32 %v2520, 7
    %v2522 = vsub.s32 0, %v2521
    %v2523 = vrot.slane %v2518, %v2522
    %v2541 = vunpack.c.l.b16 %v2502
    %v2542 = vunpack.c.l.b16 %v2503
    %v2543 = vunpack.c.l.b16 %v2504
    %v2544 = vunpack.c.l.b16 %v2505
    %v2545 = vunpack.c.l.b16 %v2506
    %v2546 = vunpack.c.l.b16 %v2507
    %v2547 = vunpack.c.l.b16 %v2508
    %v2548 = vunpack.c.l.b16 %v2509
    %v2549 = vunpack.c.l.b16 %v2510
    %v2550 = vunpack.c.l.b16 %v2511
    %v2551 = vunpack.c.l.b16 %v2512
    %v2552 = vunpack.c.l.b16 %v2513
    %v2553 = vunpack.c.l.b16 %v2514
    %v2554 = vunpack.c.l.b16 %v2515
    %v2555 = vunpack.c.l.b16 %v2516
    %v2556 = vunpack.c.l.b16 %v2517
    %v2557 = vpack.c.b16 %v2542, %v2541
    %v2558 = vpack.c.b16 %v2544, %v2543
    %v2559 = vpack.c.b16 %v2546, %v2545
    %v2560 = vpack.c.b16 %v2548, %v2547
    %v2561 = vpack.c.b16 %v2550, %v2549
    %v2562 = vpack.c.b16 %v2552, %v2551
    %v2563 = vpack.c.b16 %v2554, %v2553
    %v2564 = vpack.c.b16 %v2556, %v2555
    %2573 = vmatprep.subr.bf16.mxu0 0
    %2574 = vmatpush1.bf16.msra.mxu0 %v2557
    %2575 = vmatprep.subr.bf16.mxu0 0
    %2576 = vmatpush1.bf16.msra.mxu0 %v2558
    %2577 = vmatprep.subr.bf16.mxu0 0
    %2578 = vmatpush1.bf16.msra.mxu0 %v2559
    %2579 = vmatprep.subr.bf16.mxu0 0
    %2580 = vmatpush1.bf16.msra.mxu0 %v2560
    %2581 = vmatprep.subr.bf16.mxu0 0
    %2582 = vmatpush1.bf16.msra.mxu0 %v2561
    %2583 = vmatprep.subr.bf16.mxu0 0
    %2584 = vmatpush1.bf16.msra.mxu0 %v2562
    %2585 = vmatprep.subr.bf16.mxu0 0
    %2586 = vmatpush1.bf16.msra.mxu0 %v2563
    %2587 = vmatprep.subr.bf16.mxu0 0
    %2588 = vmatpush1.bf16.msra.mxu0 %v2564
    %2589 = vmatprep.subr.bf16.mxu0 0
    %2590 = vmatpush1.bf16.msra.mxu0 0
    %2591 = vmatprep.subr.bf16.mxu0 0
    %2592 = vmatpush1.bf16.msra.mxu0 0
    %2593 = vmatprep.subr.bf16.mxu0 0
    %2594 = vmatpush1.bf16.msra.mxu0 0
    %2595 = vmatprep.subr.bf16.mxu0 0
    %2596 = vmatpush1.bf16.msra.mxu0 0
    %2597 = vmatprep.subr.bf16.mxu0 0
    %2598 = vmatpush1.bf16.msra.mxu0 0
    %2599 = vmatprep.subr.bf16.mxu0 0
    %2600 = vmatpush1.bf16.msra.mxu0 0
    %2601 = vmatprep.subr.bf16.mxu0 0
    %2602 = vmatpush1.bf16.msra.mxu0 0
    %2603 = vmatprep.subr.bf16.mxu0 0
    %2604 = vmatpush1.bf16.msra.mxu0 0
    %2605 = vmatprep.mubr.bf16.mxu0 0
    %2606 = vmatmul.mubr.bf16.gmra.mrb[0].mxu0 %v2501
    %v2607 = vpop.f32.mrb[0].mxu0
    %v2608 = vadd.f32 %v2523, %v2607
    %v2609 = vpop.f32.mrb[0].mxu0
    %v2610 = vpop.f32.mrb[0].mxu0
    %v2611 = vadd.f32 %v2523, %v2610
    %v2612 = vpop.f32.mrb[0].mxu0
    %2613 = vdwg.mxu0
    %v2614 = vmax.f32 %v2608, 0.0
    %v2615 = vmax.f32 %v2611, 0.0
    %v2616 = vpack.c.bf16 %v2615, %v2614
    %v2617 = vld [vmem:[#allocation13] sm:$0xf]
    %v2618 = vld [vmem:[#allocation13 + $0x4] sm:$0xf]
    %v2619 = vld [vmem:[#allocation13 + $0x8] sm:$0xf]
    %v2620 = vld [vmem:[#allocation13 + $0xc] sm:$0xf]
    %v2621 = vld [vmem:[#allocation13 + $0x10] sm:$0xf]
    %v2622 = vld [vmem:[#allocation13 + $0x14] sm:$0xf]
    %v2623 = vld [vmem:[#allocation13 + $0x18] sm:$0xf]
    %v2624 = vld [vmem:[#allocation13 + $0x1c] sm:$0xf]
    %v2625 = vld [vmem:[#allocation13 + $0x20] sm:$0xf]
    %v2626 = vld [vmem:[#allocation13 + $0x24] sm:$0xf]
    %v2627 = vld [vmem:[#allocation13 + $0x28] sm:$0xf]
    %v2628 = vld [vmem:[#allocation13 + $0x2c] sm:$0xf]
    %v2629 = vld [vmem:[#allocation13 + $0x30] sm:$0xf]
    %v2630 = vld [vmem:[#allocation13 + $0x34] sm:$0xf]
    %v2631 = vld [vmem:[#allocation13 + $0x38] sm:$0xf]
    %v2632 = vld [vmem:[#allocation13 + $0x3c] sm:$0xf]
    %v2633 = vld [vmem:[%s12] sm:$0x1]
    %v2635 = vlaneseq
    %v2636 = vshrl.u32 %v2635, 7
    %v2637 = vsub.s32 0, %v2636
    %v2638 = vrot.slane %v2633, %v2637
    %v2656 = vunpack.c.l.b16 %v2617
    %v2657 = vunpack.c.l.b16 %v2618
    %v2658 = vunpack.c.l.b16 %v2619
    %v2659 = vunpack.c.l.b16 %v2620
    %v2660 = vunpack.c.l.b16 %v2621
    %v2661 = vunpack.c.l.b16 %v2622
    %v2662 = vunpack.c.l.b16 %v2623
    %v2663 = vunpack.c.l.b16 %v2624
    %v2664 = vunpack.c.l.b16 %v2625
    %v2665 = vunpack.c.l.b16 %v2626
    %v2666 = vunpack.c.l.b16 %v2627
    %v2667 = vunpack.c.l.b16 %v2628
    %v2668 = vunpack.c.l.b16 %v2629
    %v2669 = vunpack.c.l.b16 %v2630
    %v2670 = vunpack.c.l.b16 %v2631
    %v2671 = vunpack.c.l.b16 %v2632
    %v2672 = vpack.c.b16 %v2657, %v2656
    %v2673 = vpack.c.b16 %v2659, %v2658
    %v2674 = vpack.c.b16 %v2661, %v2660
    %v2675 = vpack.c.b16 %v2663, %v2662
    %v2676 = vpack.c.b16 %v2665, %v2664
    %v2677 = vpack.c.b16 %v2667, %v2666
    %v2678 = vpack.c.b16 %v2669, %v2668
    %v2679 = vpack.c.b16 %v2671, %v2670
    %2688 = vmatprep.subr.bf16.mxu0 0
    %2689 = vmatpush1.bf16.msra.mxu0 %v2672
    %2690 = vmatprep.subr.bf16.mxu0 0
    %2691 = vmatpush1.bf16.msra.mxu0 %v2673
    %2692 = vmatprep.subr.bf16.mxu0 0
    %2693 = vmatpush1.bf16.msra.mxu0 %v2674
    %2694 = vmatprep.subr.bf16.mxu0 0
    %2695 = vmatpush1.bf16.msra.mxu0 %v2675
    %2696 = vmatprep.subr.bf16.mxu0 0
    %2697 = vmatpush1.bf16.msra.mxu0 %v2676
    %2698 = vmatprep.subr.bf16.mxu0 0
    %2699 = vmatpush1.bf16.msra.mxu0 %v2677
    %2700 = vmatprep.subr.bf16.mxu0 0
    %2701 = vmatpush1.bf16.msra.mxu0 %v2678
    %2702 = vmatprep.subr.bf16.mxu0 0
    %2703 = vmatpush1.bf16.msra.mxu0 %v2679
    %2704 = vmatprep.subr.bf16.mxu0 0
    %2705 = vmatpush1.bf16.msra.mxu0 0
    %2706 = vmatprep.subr.bf16.mxu0 0
    %2707 = vmatpush1.bf16.msra.mxu0 0
    %2708 = vmatprep.subr.bf16.mxu0 0
    %2709 = vmatpush1.bf16.msra.mxu0 0
    %2710 = vmatprep.subr.bf16.mxu0 0
    %2711 = vmatpush1.bf16.msra.mxu0 0
    %2712 = vmatprep.subr.bf16.mxu0 0
    %2713 = vmatpush1.bf16.msra.mxu0 0
    %2714 = vmatprep.subr.bf16.mxu0 0
    %2715 = vmatpush1.bf16.msra.mxu0 0
    %2716 = vmatprep.subr.bf16.mxu0 0
    %2717 = vmatpush1.bf16.msra.mxu0 0
    %2718 = vmatprep.subr.bf16.mxu0 0
    %2719 = vmatpush1.bf16.msra.mxu0 0
    %2720 = vmatprep.mubr.bf16.mxu0 0
    %2721 = vmatmul.mubr.bf16.gmra.mrb[0].mxu0 %v2616
    %v2722 = vpop.f32.mrb[0].mxu0
    %v2723 = vadd.f32 %v2638, %v2722
    %v2724 = vpop.f32.mrb[0].mxu0
    %v2725 = vpop.f32.mrb[0].mxu0
    %v2726 = vadd.f32 %v2638, %v2725
    %v2727 = vpop.f32.mrb[0].mxu0
    %2728 = vdwg.mxu0
    %2729 = vmax.xlane.f32.xlu0 %v2723
    %v2730 = vpop.xlane.xlu0 %2729
    %2731 = vmax.xlane.f32.xlu0 %v2726
    %v2732 = vpop.xlane.xlu0 %2731
    %v2733 = vsub.f32 %v2723, %v2730
    %v2734 = vsub.f32 %v2726, %v2732
    %v2735 = vmul.f32 %v2733, 1.442695
    %v2736 = vpow.pop %v2735
    %v2737 = vmul.f32 %v2734, 1.442695
    %v2738 = vpow.pop %v2737
    %2739 = vadd.xlane.f32.xlu0 %v2736
    %v2740 = vpop.xlane.xlu0 %2739
    %2741 = vadd.xlane.f32.xlu0 %v2738
    %v2742 = vpop.xlane.xlu0 %2741
    %v2743 = vlog2.pop %v2740
    %v2744 = vmul.f32 %v2743, 0.6931472
    %v2745 = vlog2.pop %v2742
    %v2746 = vmul.f32 %v2745, 0.6931472
    %v2747 = vsub.f32 %v2733, %v2744
    %v2748 = vsub.f32 %v2734, %v2746
    %2749 = vst [vmem:[#allocation14] sm:$0xff] %v2747
    %2750 = vst [vmem:[#allocation14 + $0x8] sm:$0xff] %v2748
    // Predicated region
    $region82: #{tpu_custom_call.1} parent=1 // pred_check
      _
    $region83: #{tpu_custom_call.1} parent=1 // pred_check_branch
      %2752 = sbr.rel (0) target = $region85
    $region84: #{tpu_custom_call.1} parent=1 // pred_region
      %s2754 = ssub.s32 256, 256
      %2755 = vsyncadd [#allocation4], %s2754
      %s2756 = sshll.u32 [#allocation14], 4
      %s2757 = int_to_ptr.vmem [resolvable:$true] %s2756
      %2762 = dma.vmem_to_hbm [thread:$0]  %s2757, 256, %s13, [#allocation4], 128, 128, 8
    $region85: #{tpu_custom_call.1} parent=1 // pred_fallthru
      _
    // Predicated region
    $region86: #{tpu_custom_call.1} parent=1 // pred_check
      _
    $region87: #{tpu_custom_call.1} parent=1 // pred_check_branch
      %2764 = sbr.rel (0) target = $region89
    $region88: #{tpu_custom_call.1} parent=1 // pred_region
      %2765 = dma.done [#allocation4], 256
    $region89: #{tpu_custom_call.1} parent=1 // pred_fallthru
      _
    %2766 = vsyncpa [#allocation3], 1
    %2767 = vsyncpa [#allocation6], 1
    %2768 = vsyncpa [#allocation9], 1
    %2769 = vsyncpa [#allocation12], 1
    %2770 = vsyncpa [#allocation4], 1

</llo_original>
